<compile_context>
chip_gen: v6e
topology: v6e:2x2x1
jax: 0.10.0
libtpu: 0.0.40
codegen_flags: <defaults>
</compile_context>

<pallas_src>
import jax
import jax.numpy as jnp
from jax import lax
from jax.experimental import pallas as pl
from jax.experimental.pallas import tpu as pltpu


def _round_up(x, m):
    return ((x + m - 1) // m) * m


def d2rl_q_kernel(xu_ref, w_cat_ref, b_cat_ref, w2x_ref, w3x_ref, w4x_ref,
                  wo_ref, bo_ref, o_ref, pre_ref):
    cdt = w_cat_ref.dtype            # matmul operand dtype (f32 or bf16)
    hp = w2x_ref.shape[0]            # 128-aligned hidden size

    xu = xu_ref[...].astype(cdt)     # (tb, sd+ad)

    # Fused layer-1 + skip matmul: pre[:, k*hp:(k+1)*hp] == xu @ W(k+1)u + b(k+1).
    # Staged in VMEM scratch so the live range is one hp-wide slice per layer.
    pre_ref[...] = (jnp.dot(xu, w_cat_ref[...],
                            preferred_element_type=jnp.float32)
                    + b_cat_ref[...])                              # (tb, 4hp) f32

    # layer 1: relu(xu @ W1 + b1)
    x = jnp.maximum(pre_ref[:, 0:hp], 0.0)

    # layers 2..4: relu(x @ Wkx + xu @ Wku + bk)
    x = jnp.maximum(
        jnp.dot(x.astype(cdt), w2x_ref[...],
                preferred_element_type=jnp.float32) + pre_ref[:, hp:2 * hp], 0.0)
    x = jnp.maximum(
        jnp.dot(x.astype(cdt), w3x_ref[...],
                preferred_element_type=jnp.float32) + pre_ref[:, 2 * hp:3 * hp], 0.0)
    x = jnp.maximum(
        jnp.dot(x.astype(cdt), w4x_ref[...],
                preferred_element_type=jnp.float32) + pre_ref[:, 3 * hp:4 * hp], 0.0)

    # Output head: wo (1, hp) contracted with x (tb, hp) over hp -> (1, tb),
    # i.e. a lane-dense row written with unmasked stores.
    row = lax.dot_general(wo_ref[...], x,
                          dimension_numbers=(((1,), (1,)), ((), ())),
                          preferred_element_type=jnp.float32)
    o_ref[...] = row + bo_ref[0, 0]


def d2rl_q_forward(s, a, kp, *, block_b=512):
    """D2rl_Q forward with a batch-tiled Pallas kernel.

    s: (B, state_dim) f32, a: (B, action_dim) f32.
    kp: packed params from pack_kernel_params() (weight dtype == matmul dtype).
    Returns (B, 1) f32.
    """
    B, sd = s.shape
    _, ad = a.shape
    sa = sd + ad
    hp = kp["w2x"].shape[0]

    # Single host-side concat; inside the kernel the fused W_cat matmul
    # replaces all per-layer concat-skip matmuls.
    xu = jnp.concatenate([s, a], axis=1).astype(jnp.float32)      # (B, sa)

    # Batch tile: multiple of 128 (lane-dense output row, MXU-friendly M);
    # capped so big batches give >= 2 grid steps (v7x megacore sharding).
    tb = _round_up(max(min(block_b, B), 1), 128)
    if B >= 2 * 128:
        tb = min(tb, _round_up(pl.cdiv(B, 2), 128))
    grid = (pl.cdiv(B, tb),)

    def resident(arr):   # whole weight as one block, reused every grid step
        return pl.BlockSpec(arr.shape, lambda i: (0, 0))

    in_specs = [
        pl.BlockSpec((tb, sa), lambda i: (i, 0)),
        resident(kp["w_cat"]),
        resident(kp["b_cat"]),
        resident(kp["w2x"]),
        resident(kp["w3x"]),
        resident(kp["w4x"]),
        resident(kp["wo_row"]),
        pl.BlockSpec((1, 1), lambda i: (0, 0), memory_space=pltpu.SMEM),
    ]
    out_specs = pl.BlockSpec((1, tb), lambda i: (0, i))

    # VMEM budget: double-buffered xu/out tiles, double-buffered resident
    # weights (Pallas default), pre scratch, live activations, headroom.
    weight_bytes = sum(int(w.size) * w.dtype.itemsize for w in
                       (kp["w_cat"], kp["b_cat"], kp["w2x"], kp["w3x"],
                        kp["w4x"], kp["wo_row"]))
    io_bytes = 4 * tb * sa + 4 * tb
    needed = (2 * io_bytes + 2 * weight_bytes
              + 4 * tb * 4 * hp          # pre scratch (f32)
              + 2 * 4 * tb * hp          # working activations
              + (4 << 20))               # headroom

    cp_kwargs = dict(dimension_semantics=("parallel",))
    if needed > (16 << 20):              # v5e default scoped-VMEM is 16 MiB
        try:                             # cap at ~75% of this generation's VMEM
            cap = int(0.75 * pltpu.get_tpu_info().vmem_capacity_bytes)
        except Exception:
            cap = 96 << 20
        cp_kwargs["vmem_limit_bytes"] = int(min(needed, cap))

    out_row = pl.pallas_call(
        d2rl_q_kernel,
        out_shape=jax.ShapeDtypeStruct((1, B), jnp.float32),
        grid=grid,
        in_specs=in_specs,
        out_specs=out_specs,
        scratch_shapes=[pltpu.VMEM((tb, 4 * hp), jnp.float32)],
        compiler_params=pltpu.CompilerParams(**cp_kwargs),
    )(xu, kp["w_cat"], kp["b_cat"], kp["w2x"], kp["w3x"], kp["w4x"],
      kp["wo_row"], kp["bo"])

    return out_row.reshape(B, 1)


def init_raw_params(key, state_dim, action_dim, h_size):
    """Synthetic init mimicking nn.Linear; weights stored as (in, out)."""
    sa = state_dim + action_dim
    in_dim = sa + h_size

    def linear(k, fan_in, fan_out):
        kw, kb = jax.random.split(k)
        bound = 1.0 / jnp.sqrt(fan_in)
        w = jax.random.uniform(kw, (fan_in, fan_out), jnp.float32, -bound, bound)
        b = jax.random.uniform(kb, (1, fan_out), jnp.float32, -bound, bound)
        return w, b

    k1, k2, k3, k4, ko = jax.random.split(key, 5)
    w1, b1 = linear(k1, sa, h_size)
    w2, b2 = linear(k2, in_dim, h_size)
    w3, b3 = linear(k3, in_dim, h_size)
    w4, b4 = linear(k4, in_dim, h_size)
    wo, bo = linear(ko, h_size, 1)
    return dict(w1=w1, b1=b1, w2=w2, b2=b2, w3=w3, b3=b3, w4=w4, b4=b4,
                wo=wo, bo=bo)


def pack_kernel_params(raw, state_dim, action_dim, h_size,
                       weight_dtype=jnp.float32):
    """Split concat-skip weights, fuse the xu-parts, and zero-pad h to 128.

    Matmul weights are stored in `weight_dtype` (use bf16 on v5e/v6e/v7x for
    the native MXU path); biases and the output row stay f32.
    """
    sd, ad, h = state_dim, action_dim, h_size
    sa = sd + ad
    hp = _round_up(h, 128)

    def pad_out(w):            # zero-pad the output (last) dim h -> hp
        return jnp.pad(w, ((0, 0), (0, hp - h)))

    def pad_in_out(w):         # (h, h) -> (hp, hp) with zero rows/cols
        return jnp.pad(w, ((0, hp - h), (0, hp - h)))

    # xu-parts of every layer (the concat-skip weights), fused along columns.
    w1u = raw["w1"]                       # (sa, h)
    w2u = raw["w2"][h:h + sa]
    w3u = raw["w3"][h:h + sa]
    w4u = raw["w4"][h:h + sa]
    w_cat = jnp.concatenate(
        [pad_out(w1u), pad_out(w2u), pad_out(w3u), pad_out(w4u)], axis=1)
    b_cat = jnp.concatenate(
        [pad_out(raw["b1"]), pad_out(raw["b2"]),
         pad_out(raw["b3"]), pad_out(raw["b4"])], axis=1)

    return {
        "w_cat": w_cat.astype(weight_dtype),            # (sa, 4*hp)
        "b_cat": b_cat.astype(jnp.float32),              # (1, 4*hp)
        "w2x": pad_in_out(raw["w2"][:h]).astype(weight_dtype),   # (hp, hp)
        "w3x": pad_in_out(raw["w3"][:h]).astype(weight_dtype),
        "w4x": pad_in_out(raw["w4"][:h]).astype(weight_dtype),
        "wo_row": pad_out(raw["wo"].reshape(1, h)).astype(jnp.float32),
        "bo": raw["bo"].reshape(1, 1).astype(jnp.float32),
    }


def reference_forward(s, a, raw):
    """Pure-JAX reference reproducing the PyTorch module semantics."""
    xu = jnp.concatenate([s, a], axis=1)
    x = jax.nn.relu(xu @ raw["w1"] + raw["b1"])
    x = jax.nn.relu(jnp.concatenate([x, xu], 1) @ raw["w2"] + raw["b2"])
    x = jax.nn.relu(jnp.concatenate([x, xu], 1) @ raw["w3"] + raw["b3"])
    x = jax.nn.relu(jnp.concatenate([x, xu], 1) @ raw["w4"] + raw["b4"])
    return x @ raw["wo"] + raw["bo"]


if __name__ == "__main__":
    state_dim, action_dim, h_size = 8, 4, 32

    key = jax.random.PRNGKey(0)
    kparam_key, ks, ka = jax.random.split(key, 3)
    raw = init_raw_params(kparam_key, state_dim, action_dim, h_size)

    # f32-stored weights, single tile.
    kp_f32 = pack_kernel_params(raw, state_dim, action_dim, h_size,
                                weight_dtype=jnp.float32)
    s = jax.random.normal(ks, (2, state_dim), jnp.float32)
    a = jax.random.normal(ka, (2, action_dim), jnp.float32)
    out = jax.block_until_ready(d2rl_q_forward(s, a, kp_f32))
    ref = reference_forward(s, a, raw)
    assert out.shape == (2, 1)
    assert jnp.allclose(out, ref, atol=1e-5, rtol=1e-5), (out, ref)

    # f32 path, multiple 128-row batch tiles + a partial last tile.
    big_b = 300
    s2 = jax.random.normal(jax.random.PRNGKey(1), (big_b, state_dim), jnp.float32)
    a2 = jax.random.normal(jax.random.PRNGKey(2), (big_b, action_dim), jnp.float32)
    out2 = jax.block_until_ready(d2rl_q_forward(s2, a2, kp_f32, block_b=128))
    ref2 = reference_forward(s2, a2, raw)
    assert out2.shape == (big_b, 1)
    assert jnp.allclose(out2, ref2, atol=1e-5, rtol=1e-5), (out2, ref2)

    # bf16-stored weights (v5e/v6e/v7x MXU fast path), f32 accumulate/elementwise.
    kp_bf16 = pack_kernel_params(raw, state_dim, action_dim, h_size,
                                 weight_dtype=jnp.bfloat16)
    out_bf16 = jax.block_until_ready(d2rl_q_forward(s2, a2, kp_bf16, block_b=128))
    assert jnp.allclose(out_bf16, ref2, atol=7.5e-2, rtol=7.5e-2), (out_bf16, ref2)

    print("KERNEL_OK")
</pallas_src>

<mosaic_0001>
module attributes {stable_mosaic.version = 11 : i64} {
  func.func @d2rl_q_kernel(%arg0: i32, %arg1: memref<128x12xf32, #tpu.memory_space<vmem>>, %arg2: memref<12x512xf32, #tpu.memory_space<vmem>>, %arg3: memref<1x512xf32, #tpu.memory_space<vmem>>, %arg4: memref<128x128xf32, #tpu.memory_space<vmem>>, %arg5: memref<128x128xf32, #tpu.memory_space<vmem>>, %arg6: memref<128x128xf32, #tpu.memory_space<vmem>>, %arg7: memref<1x128xf32, #tpu.memory_space<vmem>>, %arg8: memref<1x1xf32, #tpu.memory_space<smem>>, %arg9: memref<1x128xf32, #tpu.memory_space<vmem>>, %arg10: memref<128x512xf32, #tpu.memory_space<vmem>>) attributes {dimension_semantics = [#tpu.dimension_semantics<parallel>], iteration_bounds = array<i64: 1>, scalar_prefetch = 0 : i64, scratch_operands = 1 : i64, tpu.core_type = #tpu.core_type<tc>, window_params = [{transform_indices = @transform_0, window_bounds = array<i64: 128, 12>}, {pipeline_mode = #tpu.pipeline_mode<synchronous>, transform_indices = @transform_1, window_bounds = array<i64: 12, 512>}, {pipeline_mode = #tpu.pipeline_mode<synchronous>, transform_indices = @transform_2, window_bounds = array<i64: 1, 512>}, {pipeline_mode = #tpu.pipeline_mode<synchronous>, transform_indices = @transform_3, window_bounds = array<i64: 128, 128>}, {pipeline_mode = #tpu.pipeline_mode<synchronous>, transform_indices = @transform_4, window_bounds = array<i64: 128, 128>}, {pipeline_mode = #tpu.pipeline_mode<synchronous>, transform_indices = @transform_5, window_bounds = array<i64: 128, 128>}, {pipeline_mode = #tpu.pipeline_mode<synchronous>, transform_indices = @transform_6, window_bounds = array<i64: 1, 128>}, {transform_indices = @transform_7, window_bounds = array<i64: 1, 1>}, {transform_indices = @transform_8, window_bounds = array<i64: 1, 128>}]} {
    %c0 = arith.constant 0 : index
    %c0_0 = arith.constant 0 : index
    %0 = vector.load %arg1[%c0, %c0_0] : memref<128x12xf32, #tpu.memory_space<vmem>>, vector<128x12xf32>
    %c0_1 = arith.constant 0 : index
    %c0_2 = arith.constant 0 : index
    %1 = vector.load %arg2[%c0_1, %c0_2] : memref<12x512xf32, #tpu.memory_space<vmem>>, vector<12x512xf32>
    %cst = arith.constant dense<0.000000e+00> : vector<128x512xf32>
    %2 = tpu.matmul %0, %1, %cst {dimension_numbers = #tpu.dot_dimension_numbers<[1], [0], [0], [1], [0, 0, 1, 1], [], []>} : vector<128x12xf32>, vector<12x512xf32>, vector<128x512xf32> -> vector<128x512xf32>
    %c0_3 = arith.constant 0 : index
    %c0_4 = arith.constant 0 : index
    %3 = vector.load %arg3[%c0_3, %c0_4] : memref<1x512xf32, #tpu.memory_space<vmem>>, vector<1x512xf32>
    %4 = vector.broadcast %3 : vector<1x512xf32> to vector<128x512xf32>
    %5 = arith.addf %2, %4 : vector<128x512xf32>
    %c0_5 = arith.constant 0 : index
    %c0_6 = arith.constant 0 : index
    %6 = vector.load %arg10[%c0_5, %c0_6] : memref<128x512xf32, #tpu.memory_space<vmem>>, vector<128x512xf32>
    tpu.vector_store %arg10[%c0_5, %c0_6], %5 {strides = array<i32>} : memref<128x512xf32, #tpu.memory_space<vmem>>, vector<128x512xf32>,
    %c0_7 = arith.constant 0 : index
    %c0_8 = arith.constant 0 : index
    %7 = vector.load %arg10[%c0_7, %c0_8] : memref<128x512xf32, #tpu.memory_space<vmem>>, vector<128x128xf32>
    %cst_9 = arith.constant 0.000000e+00 : f32
    %8 = vector.broadcast %cst_9 : f32 to vector<128x128xf32>
    %9 = arith.maximumf %7, %8 : vector<128x128xf32>
    %c0_10 = arith.constant 0 : index
    %c0_11 = arith.constant 0 : index
    %10 = vector.load %arg4[%c0_10, %c0_11] : memref<128x128xf32, #tpu.memory_space<vmem>>, vector<128x128xf32>
    %cst_12 = arith.constant dense<0.000000e+00> : vector<128x128xf32>
    %11 = tpu.matmul %9, %10, %cst_12 {dimension_numbers = #tpu.dot_dimension_numbers<[1], [0], [0], [1], [0, 0, 1, 1], [], []>} : vector<128x128xf32>, vector<128x128xf32>, vector<128x128xf32> -> vector<128x128xf32>
    %c0_13 = arith.constant 0 : index
    %c128 = arith.constant 128 : index
    %12 = vector.load %arg10[%c0_13, %c128] : memref<128x512xf32, #tpu.memory_space<vmem>>, vector<128x128xf32>
    %13 = arith.addf %11, %12 : vector<128x128xf32>
    %cst_14 = arith.constant 0.000000e+00 : f32
    %14 = vector.broadcast %cst_14 : f32 to vector<128x128xf32>
    %15 = arith.maximumf %13, %14 : vector<128x128xf32>
    %c0_15 = arith.constant 0 : index
    %c0_16 = arith.constant 0 : index
    %16 = vector.load %arg5[%c0_15, %c0_16] : memref<128x128xf32, #tpu.memory_space<vmem>>, vector<128x128xf32>
    %cst_17 = arith.constant dense<0.000000e+00> : vector<128x128xf32>
    %17 = tpu.matmul %15, %16, %cst_17 {dimension_numbers = #tpu.dot_dimension_numbers<[1], [0], [0], [1], [0, 0, 1, 1], [], []>} : vector<128x128xf32>, vector<128x128xf32>, vector<128x128xf32> -> vector<128x128xf32>
    %c0_18 = arith.constant 0 : index
    %c256 = arith.constant 256 : index
    %18 = vector.load %arg10[%c0_18, %c256] : memref<128x512xf32, #tpu.memory_space<vmem>>, vector<128x128xf32>
    %19 = arith.addf %17, %18 : vector<128x128xf32>
    %cst_19 = arith.constant 0.000000e+00 : f32
    %20 = vector.broadcast %cst_19 : f32 to vector<128x128xf32>
    %21 = arith.maximumf %19, %20 : vector<128x128xf32>
    %c0_20 = arith.constant 0 : index
    %c0_21 = arith.constant 0 : index
    %22 = vector.load %arg6[%c0_20, %c0_21] : memref<128x128xf32, #tpu.memory_space<vmem>>, vector<128x128xf32>
    %cst_22 = arith.constant dense<0.000000e+00> : vector<128x128xf32>
    %23 = tpu.matmul %21, %22, %cst_22 {dimension_numbers = #tpu.dot_dimension_numbers<[1], [0], [0], [1], [0, 0, 1, 1], [], []>} : vector<128x128xf32>, vector<128x128xf32>, vector<128x128xf32> -> vector<128x128xf32>
    %c0_23 = arith.constant 0 : index
    %c384 = arith.constant 384 : index
    %24 = vector.load %arg10[%c0_23, %c384] : memref<128x512xf32, #tpu.memory_space<vmem>>, vector<128x128xf32>
    %25 = arith.addf %23, %24 : vector<128x128xf32>
    %cst_24 = arith.constant 0.000000e+00 : f32
    %26 = vector.broadcast %cst_24 : f32 to vector<128x128xf32>
    %27 = arith.maximumf %25, %26 : vector<128x128xf32>
    %c0_25 = arith.constant 0 : index
    %c0_26 = arith.constant 0 : index
    %28 = vector.load %arg7[%c0_25, %c0_26] : memref<1x128xf32, #tpu.memory_space<vmem>>, vector<1x128xf32>
    %cst_27 = arith.constant dense<0.000000e+00> : vector<1x128xf32>
    %29 = tpu.matmul %28, %27, %cst_27 {dimension_numbers = #tpu.dot_dimension_numbers<[1], [1], [0], [0], [0, 0, 1, 0], [], []>} : vector<1x128xf32>, vector<128x128xf32>, vector<1x128xf32> -> vector<1x128xf32>
    %c0_28 = arith.constant 0 : index
    %c0_29 = arith.constant 0 : index
    %30 = memref.load %arg8[%c0_28, %c0_29] : memref<1x1xf32, #tpu.memory_space<smem>>
    %31 = vector.broadcast %30 : f32 to vector<1x128xf32>
    %32 = arith.addf %29, %31 : vector<1x128xf32>
    %c0_30 = arith.constant 0 : index
    %c0_31 = arith.constant 0 : index
    %33 = vector.load %arg9[%c0_30, %c0_31] : memref<1x128xf32, #tpu.memory_space<vmem>>, vector<1x128xf32>
    tpu.vector_store %arg9[%c0_30, %c0_31], %32 {strides = array<i32>} : memref<1x128xf32, #tpu.memory_space<vmem>>, vector<1x128xf32>,
    return
  }
  func.func @transform_0(%arg0: i32) -> (i32, i32) {
    %c0_i32 = arith.constant 0 : i32
    %c0_i32_0 = arith.constant 0 : i32
    return %arg0, %c0_i32 : i32, i32
  }
  func.func @transform_1(%arg0: i32) -> (i32, i32) {
    %c0_i32 = arith.constant 0 : i32
    %c0_i32_0 = arith.constant 0 : i32
    %c0_i32_1 = arith.constant 0 : i32
    return %c0_i32, %c0_i32_0 : i32, i32
  }
  func.func @transform_2(%arg0: i32) -> (i32, i32) {
    %c0_i32 = arith.constant 0 : i32
    %c0_i32_0 = arith.constant 0 : i32
    %c0_i32_1 = arith.constant 0 : i32
    return %c0_i32, %c0_i32_0 : i32, i32
  }
  func.func @transform_3(%arg0: i32) -> (i32, i32) {
    %c0_i32 = arith.constant 0 : i32
    %c0_i32_0 = arith.constant 0 : i32
    %c0_i32_1 = arith.constant 0 : i32
    return %c0_i32, %c0_i32_0 : i32, i32
  }
  func.func @transform_4(%arg0: i32) -> (i32, i32) {
    %c0_i32 = arith.constant 0 : i32
    %c0_i32_0 = arith.constant 0 : i32
    %c0_i32_1 = arith.constant 0 : i32
    return %c0_i32, %c0_i32_0 : i32, i32
  }
  func.func @transform_5(%arg0: i32) -> (i32, i32) {
    %c0_i32 = arith.constant 0 : i32
    %c0_i32_0 = arith.constant 0 : i32
    %c0_i32_1 = arith.constant 0 : i32
    return %c0_i32, %c0_i32_0 : i32, i32
  }
  func.func @transform_6(%arg0: i32) -> (i32, i32) {
    %c0_i32 = arith.constant 0 : i32
    %c0_i32_0 = arith.constant 0 : i32
    %c0_i32_1 = arith.constant 0 : i32
    return %c0_i32, %c0_i32_0 : i32, i32
  }
  func.func @transform_7(%arg0: i32) -> (i32, i32) {
    %c0_i32 = arith.constant 0 : i32
    %c0_i32_0 = arith.constant 0 : i32
    %c0_i32_1 = arith.constant 0 : i32
    return %c0_i32, %c0_i32_0 : i32, i32
  }
  func.func @transform_8(%arg0: i32) -> (i32, i32) {
    %c0_i32 = arith.constant 0 : i32
    %c0_i32_0 = arith.constant 0 : i32
    return %c0_i32, %arg0 : i32, i32
  }
}

</mosaic_0001>

<llo_original>
// kernel: tpu_custom_call.1
$region0: #{tpu_custom_call.1}
  #allocation0 [shape = 'u32[]', space=smem, size = 0x4, offset = 0x4, fixed_abs, tag = 'smem constant byte address 0x4 - core index']
  #allocation1 [shape = 'u32[144,128]{1,0:T(1,128)}', space=vmem, size = 0x12000, scoped, tag = 'internal scratch']
  #allocation2 [shape = 'f32[128,512]{1,0:T(8,128)}', space=vmem, size = 0x40000, scoped, tag = 'scratch operand']
  #allocation3 [shape = 'f32[1,1]{1,0:T(1,128)S(6)}', space=smem, size = 0x200, scoped, tag = 'scoped memory for tpu_custom_call.1']
  %s0 = inlined_call_operand.hbm [shape: f32[2,12], index: 0, kind: input, shape index: {}]
  %s1 = inlined_call_operand.hbm [shape: f32[12,512], index: 1, kind: input, shape index: {}]
  %s2 = inlined_call_operand.vmem [shape: f32[1,512], index: 2, kind: input, shape index: {}]
  %s3 = inlined_call_operand.hbm [shape: f32[128,128], index: 3, kind: input, shape index: {}]
  %s4 = inlined_call_operand.hbm [shape: f32[128,128], index: 4, kind: input, shape index: {}]
  %s5 = inlined_call_operand.hbm [shape: f32[128,128], index: 5, kind: input, shape index: {}]
  %s6 = inlined_call_operand.vmem [shape: f32[1,128], index: 6, kind: input, shape index: {}]
  %s7 = inlined_call_operand.<no memory space> [shape: f32[1,1], index: 7, kind: input, shape index: {}]
  %s8 = inlined_call_operand.hbm [shape: f32[1,2], index: 8, kind: output, shape index: {}]
  %s9 = sld [smem:[#allocation0]]
  $region62: #{tpu_custom_call.1} parent=0
    _
  %s11 = ssub.s32 1, %s9
  %s12 = scalar_select 0, %s11, %s9
  %13 = sst [smem:[#allocation3]] %s7
  $region1: #{tpu_custom_call.1} parent=0
    #allocation4 [shape = 'u8[65536]{0}', space=vmem, size = 0x10000, scoped, tag = 'input window, operand 0, single buffered']
    #allocation5 [shape = 's32[1]{0}', space=sflag, size = 0x4, scoped, tag = 'scoped memory for tpu_custom_call.1']
    #allocation6 [shape = 's32[1]{0}', space=sflag, size = 0x4, scoped, tag = 'scoped memory for tpu_custom_call.1']
    #allocation7 [shape = 'u8[32768]{0}', space=vmem, size = 0x8000, scoped, tag = 'input window, operand 1, single buffered']
    #allocation8 [shape = 's32[1]{0}', space=sflag, size = 0x4, scoped, tag = 'scoped memory for tpu_custom_call.1']
    #allocation9 [shape = 'u8[65536]{0}', space=vmem, size = 0x10000, scoped, tag = 'input window, operand 3, single buffered']
    #allocation10 [shape = 'u8[65536]{0}', space=vmem, size = 0x10000, scoped, tag = 'input window, operand 4, single buffered']
    #allocation11 [shape = 's32[1]{0}', space=sflag, size = 0x4, scoped, tag = 'scoped memory for tpu_custom_call.1']
    #allocation12 [shape = 'u8[65536]{0}', space=vmem, size = 0x10000, scoped, tag = 'input window, operand 5, single buffered']
    #allocation13 [shape = 'u8[512]{0}', space=vmem, size = 0x400, scoped, tag = 'output window, operand 0, single buffered']
    %14 = vsyncpa [#allocation5], 0
    %15 = vsyncpa [#allocation8], 0
    %16 = vsyncpa [#allocation11], 0
    %17 = vsyncpa [#allocation6], 0
    // Predicated region
    $region2: #{tpu_custom_call.1} parent=1 // pred_check
      _
    $region3: #{tpu_custom_call.1} parent=1 // pred_check_branch
      %19 = sbr.rel (0) target = $region5
    $region4: #{tpu_custom_call.1} parent=1 // pred_region
      %s21 = ssub.s32 2048, 32
      %22 = vsyncadd [#allocation5], %s21
      %s23 = sshll.u32 [#allocation4], 4
      %s24 = int_to_ptr.vmem [resolvable:$true] %s23
      %29 = dma.hbm_to_vmem [thread:$0]  %s0, 32, %s24, [#allocation5], 32, 32, 2
    $region5: #{tpu_custom_call.1} parent=1 // pred_fallthru
      _
    // Predicated region
    $region6: #{tpu_custom_call.1} parent=1 // pred_check
      _
    $region7: #{tpu_custom_call.1} parent=1 // pred_check_branch
      %31 = sbr.rel (0) target = $region9
    $region8: #{tpu_custom_call.1} parent=1 // pred_region
      %s33 = ssub.s32 1024, 1024
      %34 = vsyncadd [#allocation8], %s33
      %s35 = sshll.u32 [#allocation7], 4
      %s36 = int_to_ptr.vmem [resolvable:$true] %s35
      %41 = dma.hbm_to_vmem [thread:$0]  %s1, 1024, %s36, [#allocation8], 512, 512, 32
    $region9: #{tpu_custom_call.1} parent=1 // pred_fallthru
      _
    // Predicated region
    $region10: #{tpu_custom_call.1} parent=1 // pred_check
      _
    $region11: #{tpu_custom_call.1} parent=1 // pred_check_branch
      %43 = sbr.rel (0) target = $region13
    $region12: #{tpu_custom_call.1} parent=1 // pred_region
      _
    $region13: #{tpu_custom_call.1} parent=1 // pred_fallthru
      _
    // Predicated region
    $region14: #{tpu_custom_call.1} parent=1 // pred_check
      _
    $region15: #{tpu_custom_call.1} parent=1 // pred_check_branch
      %45 = sbr.rel (0) target = $region17
    $region16: #{tpu_custom_call.1} parent=1 // pred_region
      %s47 = ssub.s32 2048, 2048
      %48 = vsyncadd [#allocation8], %s47
      %s49 = sshll.u32 [#allocation9], 4
      %s50 = int_to_ptr.vmem [resolvable:$true] %s49
      %55 = dma.hbm_to_vmem [thread:$0]  %s3, 2048, %s50, [#allocation8], 128, 128, 8
    $region17: #{tpu_custom_call.1} parent=1 // pred_fallthru
      _
    // Predicated region
    $region18: #{tpu_custom_call.1} parent=1 // pred_check
      _
    $region19: #{tpu_custom_call.1} parent=1 // pred_check_branch
      %57 = sbr.rel (0) target = $region21
    $region20: #{tpu_custom_call.1} parent=1 // pred_region
      %s59 = ssub.s32 2048, 2048
      %60 = vsyncadd [#allocation11], %s59
      %s61 = sshll.u32 [#allocation10], 4
      %s62 = int_to_ptr.vmem [resolvable:$true] %s61
      %67 = dma.hbm_to_vmem [thread:$0]  %s4, 2048, %s62, [#allocation11], 128, 128, 8
    $region21: #{tpu_custom_call.1} parent=1 // pred_fallthru
      _
    // Predicated region
    $region22: #{tpu_custom_call.1} parent=1 // pred_check
      _
    $region23: #{tpu_custom_call.1} parent=1 // pred_check_branch
      %69 = sbr.rel (0) target = $region25
    $region24: #{tpu_custom_call.1} parent=1 // pred_region
      %s71 = ssub.s32 2048, 2048
      %72 = vsyncadd [#allocation11], %s71
      %s73 = sshll.u32 [#allocation12], 4
      %s74 = int_to_ptr.vmem [resolvable:$true] %s73
      %79 = dma.hbm_to_vmem [thread:$0]  %s5, 2048, %s74, [#allocation11], 128, 128, 8
    $region25: #{tpu_custom_call.1} parent=1 // pred_fallthru
      _
    // Predicated region
    $region26: #{tpu_custom_call.1} parent=1 // pred_check
      _
    $region27: #{tpu_custom_call.1} parent=1 // pred_check_branch
      %81 = sbr.rel (0) target = $region29
    $region28: #{tpu_custom_call.1} parent=1 // pred_region
      _
    $region29: #{tpu_custom_call.1} parent=1 // pred_fallthru
      _
    // Predicated region
    $region30: #{tpu_custom_call.1} parent=1 // pred_check
      _
    $region31: #{tpu_custom_call.1} parent=1 // pred_check_branch
      %83 = sbr.rel (0) target = $region33
    $region32: #{tpu_custom_call.1} parent=1 // pred_region
      _
    $region33: #{tpu_custom_call.1} parent=1 // pred_fallthru
      _
    // Predicated region
    $region34: #{tpu_custom_call.1} parent=1 // pred_check
      _
    $region35: #{tpu_custom_call.1} parent=1 // pred_check_branch
      %85 = sbr.rel (0) target = $region37
    $region36: #{tpu_custom_call.1} parent=1 // pred_region
      %86 = dma.done [#allocation5], 2048
    $region37: #{tpu_custom_call.1} parent=1 // pred_fallthru
      _
    // Predicated region
    $region38: #{tpu_custom_call.1} parent=1 // pred_check
      _
    $region39: #{tpu_custom_call.1} parent=1 // pred_check_branch
      %88 = sbr.rel (0) target = $region41
    $region40: #{tpu_custom_call.1} parent=1 // pred_region
      %89 = dma.done [#allocation8], 1024
    $region41: #{tpu_custom_call.1} parent=1 // pred_fallthru
      _
    // Predicated region
    $region42: #{tpu_custom_call.1} parent=1 // pred_check
      _
    $region43: #{tpu_custom_call.1} parent=1 // pred_check_branch
      %91 = sbr.rel (0) target = $region45
    $region44: #{tpu_custom_call.1} parent=1 // pred_region
      %92 = dma.done [#allocation8], 2048
    $region45: #{tpu_custom_call.1} parent=1 // pred_fallthru
      _
    // Predicated region
    $region46: #{tpu_custom_call.1} parent=1 // pred_check
      _
    $region47: #{tpu_custom_call.1} parent=1 // pred_check_branch
      %94 = sbr.rel (0) target = $region49
    $region48: #{tpu_custom_call.1} parent=1 // pred_region
      %95 = dma.done [#allocation11], 2048
    $region49: #{tpu_custom_call.1} parent=1 // pred_fallthru
      _
    // Predicated region
    $region50: #{tpu_custom_call.1} parent=1 // pred_check
      _
    $region51: #{tpu_custom_call.1} parent=1 // pred_check_branch
      %97 = sbr.rel (0) target = $region53
    $region52: #{tpu_custom_call.1} parent=1 // pred_region
      %98 = dma.done [#allocation11], 2048
    $region53: #{tpu_custom_call.1} parent=1 // pred_fallthru
      _
    %v99 = vld [vmem:[#allocation4] sm:$0xff]
    %v100 = vld [vmem:[#allocation4 + $0x8] sm:$0xff]
    %v101 = vld [vmem:[#allocation4 + $0x10] sm:$0xff]
    %v102 = vld [vmem:[#allocation4 + $0x18] sm:$0xff]
    %v103 = vld [vmem:[#allocation4 + $0x20] sm:$0xff]
    %v104 = vld [vmem:[#allocation4 + $0x28] sm:$0xff]
    %v105 = vld [vmem:[#allocation4 + $0x30] sm:$0xff]
    %v106 = vld [vmem:[#allocation4 + $0x38] sm:$0xff]
    %v107 = vld [vmem:[#allocation4 + $0x40] sm:$0xff]
    %v108 = vld [vmem:[#allocation4 + $0x48] sm:$0xff]
    %v109 = vld [vmem:[#allocation4 + $0x50] sm:$0xff]
    %v110 = vld [vmem:[#allocation4 + $0x58] sm:$0xff]
    %v111 = vld [vmem:[#allocation4 + $0x60] sm:$0xff]
    %v112 = vld [vmem:[#allocation4 + $0x68] sm:$0xff]
    %v113 = vld [vmem:[#allocation4 + $0x70] sm:$0xff]
    %v114 = vld [vmem:[#allocation4 + $0x78] sm:$0xff]
    %v115 = vld [vmem:[#allocation7] sm:$0xff]
    %v116 = vld [vmem:[#allocation7 + $0x8] sm:$0xff]
    %v117 = vld [vmem:[#allocation7 + $0x10] sm:$0xff]
    %v118 = vld [vmem:[#allocation7 + $0x18] sm:$0xff]
    %v119 = vld [vmem:[#allocation7 + $0x20] sm:$0xf]
    %v120 = vld [vmem:[#allocation7 + $0x28] sm:$0xf]
    %v121 = vld [vmem:[#allocation7 + $0x30] sm:$0xf]
    %v122 = vld [vmem:[#allocation7 + $0x38] sm:$0xf]
    %v123 = vld [vmem:[%s2] sm:$0xf]
    %v125 = vlaneseq
    %v126 = vshrl.u32 %v125, 7
    %v127 = vsub.s32 0, %v126
    %v128 = vrot.slane %v123, %v127
    %v129 = vlaneseq
    %v130 = vshrl.u32 %v129, 7
    %v131 = vsub.s32 1, %v130
    %v132 = vrot.slane %v123, %v131
    %v133 = vlaneseq
    %v134 = vshrl.u32 %v133, 7
    %v135 = vsub.s32 2, %v134
    %v136 = vrot.slane %v123, %v135
    %v137 = vlaneseq
    %v138 = vshrl.u32 %v137, 7
    %v139 = vsub.s32 3, %v138
    %v140 = vrot.slane %v123, %v139
    %vm145 = vcmask 97280
    %v147 = vsel %vm145, %v99, 0
    %v150 = vsel %vm145, %v100, 0
    %v153 = vsel %vm145, %v101, 0
    %v156 = vsel %vm145, %v102, 0
    %v159 = vsel %vm145, %v103, 0
    %v162 = vsel %vm145, %v104, 0
    %v165 = vsel %vm145, %v105, 0
    %v168 = vsel %vm145, %v106, 0
    %v171 = vsel %vm145, %v107, 0
    %v174 = vsel %vm145, %v108, 0
    %v177 = vsel %vm145, %v109, 0
    %v180 = vsel %vm145, %v110, 0
    %v183 = vsel %vm145, %v111, 0
    %v186 = vsel %vm145, %v112, 0
    %v189 = vsel %vm145, %v113, 0
    %v192 = vsel %vm145, %v114, 0
    %vm194 = vcmask 1043456
    %v196 = vsel %vm194, %v119, 0
    %v199 = vsel %vm194, %v120, 0
    %v202 = vsel %vm194, %v121, 0
    %v205 = vsel %vm194, %v122, 0
    %207 = vmatprep.subr.mxu0 0.0
    %208 = vmatpush1.msra.mxu0 0.0
    %209 = vmatprep.subr.mxu0 0.0
    %210 = vmatpush1.msra.mxu0 0.0
    %211 = vmatprep.subr.mxu0 0.0
    %212 = vmatpush1.msra.mxu0 0.0
    %213 = vmatprep.subr.mxu0 0.0
    %214 = vmatpush1.msra.mxu0 0.0
    %215 = vmatprep.subr.mxu0 0.0
    %216 = vmatpush1.msra.mxu0 0.0
    %217 = vmatprep.subr.mxu0 0.0
    %218 = vmatpush1.msra.mxu0 0.0
    %219 = vmatprep.subr.mxu0 0.0
    %220 = vmatpush1.msra.mxu0 0.0
    %221 = vmatprep.subr.mxu0 0.0
    %222 = vmatpush1.msra.mxu0 0.0
    %223 = vmatprep.subr.mxu0 0.0
    %224 = vmatpush1.msra.mxu0 0.0
    %225 = vmatprep.subr.mxu0 0.0
    %226 = vmatpush1.msra.mxu0 0.0
    %227 = vmatprep.subr.mxu0 0.0
    %228 = vmatpush1.msra.mxu0 0.0
    %229 = vmatprep.subr.mxu0 0.0
    %230 = vmatpush1.msra.mxu0 0.0
    %231 = vmatprep.subr.mxu0 0.0
    %232 = vmatpush1.msra.mxu0 0.0
    %233 = vmatprep.subr.mxu0 0.0
    %234 = vmatpush1.msra.mxu0 0.0
    %235 = vmatprep.subr.mxu0 %v199
    %236 = vmatpush1.msra.mxu0 %v196
    %237 = vmatprep.subr.mxu0 %v116
    %238 = vmatpush1.msra.mxu0 %v115
    %239 = vmatprep.subr.mxu0 0.0
    %240 = vmatpush2.msra.mxu0 0.0
    %241 = vmatprep.subr.mxu0 0.0
    %242 = vmatpush2.msra.mxu0 0.0
    %243 = vmatprep.subr.mxu0 0.0
    %244 = vmatpush2.msra.mxu0 0.0
    %245 = vmatprep.subr.mxu0 0.0
    %246 = vmatpush2.msra.mxu0 0.0
    %247 = vmatprep.subr.mxu0 0.0
    %248 = vmatpush2.msra.mxu0 0.0
    %249 = vmatprep.subr.mxu0 0.0
    %250 = vmatpush2.msra.mxu0 0.0
    %251 = vmatprep.subr.mxu0 0.0
    %252 = vmatpush2.msra.mxu0 0.0
    %253 = vmatprep.subr.mxu0 0.0
    %254 = vmatpush2.msra.mxu0 0.0
    %255 = vmatprep.subr.mxu0 0.0
    %256 = vmatpush2.msra.mxu0 0.0
    %257 = vmatprep.subr.mxu0 0.0
    %258 = vmatpush2.msra.mxu0 0.0
    %259 = vmatprep.subr.mxu0 0.0
    %260 = vmatpush2.msra.mxu0 0.0
    %261 = vmatprep.subr.mxu0 0.0
    %262 = vmatpush2.msra.mxu0 0.0
    %263 = vmatprep.subr.mxu0 0.0
    %264 = vmatpush2.msra.mxu0 0.0
    %265 = vmatprep.subr.mxu0 0.0
    %266 = vmatpush2.msra.mxu0 0.0
    %267 = vmatprep.subr.mxu0 0.0
    %268 = vmatpush2.msra.mxu0 0.0
    %269 = vmatprep.subr.mxu0 0.0
    %270 = vmatpush2.msra.mxu0 0.0
    %271 = vmatprep.mubr.f32.mxu0 0.0
    %272 = vmatmul.mubr.f32.gmra.mxu0 %v147
    %v273 = vpop.f32.mrf.mxu0
    %v274 = vadd.f32 %v128, %v273
    %v275 = vpop.f32.mrf.mxu0
    %v276 = vadd.f32 %v132, %v275
    %277 = vmatprep.mubr.f32.mxu0 0.0
    %278 = vmatmul.mubr.f32.gmra.mxu0 %v150
    %v279 = vpop.f32.mrf.mxu0
    %v280 = vadd.f32 %v128, %v279
    %v281 = vpop.f32.mrf.mxu0
    %v282 = vadd.f32 %v132, %v281
    %283 = vmatprep.mubr.f32.mxu0 0.0
    %284 = vmatmul.mubr.f32.gmra.mxu0 %v153
    %v285 = vpop.f32.mrf.mxu0
    %v286 = vadd.f32 %v128, %v285
    %v287 = vpop.f32.mrf.mxu0
    %v288 = vadd.f32 %v132, %v287
    %289 = vmatprep.mubr.f32.mxu0 0.0
    %290 = vmatmul.mubr.f32.gmra.mxu0 %v156
    %v291 = vpop.f32.mrf.mxu0
    %v292 = vadd.f32 %v128, %v291
    %v293 = vpop.f32.mrf.mxu0
    %v294 = vadd.f32 %v132, %v293
    %295 = vmatprep.mubr.f32.mxu0 0.0
    %296 = vmatmul.mubr.f32.gmra.mxu0 %v159
    %v297 = vpop.f32.mrf.mxu0
    %v298 = vadd.f32 %v128, %v297
    %v299 = vpop.f32.mrf.mxu0
    %v300 = vadd.f32 %v132, %v299
    %301 = vmatprep.mubr.f32.mxu0 0.0
    %302 = vmatmul.mubr.f32.gmra.mxu0 %v162
    %v303 = vpop.f32.mrf.mxu0
    %v304 = vadd.f32 %v128, %v303
    %v305 = vpop.f32.mrf.mxu0
    %v306 = vadd.f32 %v132, %v305
    %307 = vmatprep.mubr.f32.mxu0 0.0
    %308 = vmatmul.mubr.f32.gmra.mxu0 %v165
    %v309 = vpop.f32.mrf.mxu0
    %v310 = vadd.f32 %v128, %v309
    %v311 = vpop.f32.mrf.mxu0
    %v312 = vadd.f32 %v132, %v311
    %313 = vmatprep.mubr.f32.mxu0 0.0
    %314 = vmatmul.mubr.f32.gmra.mxu0 %v168
    %v315 = vpop.f32.mrf.mxu0
    %v316 = vadd.f32 %v128, %v315
    %v317 = vpop.f32.mrf.mxu0
    %v318 = vadd.f32 %v132, %v317
    %319 = vmatprep.mubr.f32.mxu0 0.0
    %320 = vmatmul.mubr.f32.gmra.mxu0 %v171
    %v321 = vpop.f32.mrf.mxu0
    %v322 = vadd.f32 %v128, %v321
    %v323 = vpop.f32.mrf.mxu0
    %v324 = vadd.f32 %v132, %v323
    %325 = vmatprep.mubr.f32.mxu0 0.0
    %326 = vmatmul.mubr.f32.gmra.mxu0 %v174
    %v327 = vpop.f32.mrf.mxu0
    %v328 = vadd.f32 %v128, %v327
    %v329 = vpop.f32.mrf.mxu0
    %v330 = vadd.f32 %v132, %v329
    %331 = vmatprep.mubr.f32.mxu0 0.0
    %332 = vmatmul.mubr.f32.gmra.mxu0 %v177
    %v333 = vpop.f32.mrf.mxu0
    %v334 = vadd.f32 %v128, %v333
    %v335 = vpop.f32.mrf.mxu0
    %v336 = vadd.f32 %v132, %v335
    %337 = vmatprep.mubr.f32.mxu0 0.0
    %338 = vmatmul.mubr.f32.gmra.mxu0 %v180
    %v339 = vpop.f32.mrf.mxu0
    %v340 = vadd.f32 %v128, %v339
    %v341 = vpop.f32.mrf.mxu0
    %v342 = vadd.f32 %v132, %v341
    %343 = vmatprep.mubr.f32.mxu0 0.0
    %344 = vmatmul.mubr.f32.gmra.mxu0 %v183
    %v345 = vpop.f32.mrf.mxu0
    %v346 = vadd.f32 %v128, %v345
    %v347 = vpop.f32.mrf.mxu0
    %v348 = vadd.f32 %v132, %v347
    %349 = vmatprep.mubr.f32.mxu0 0.0
    %350 = vmatmul.mubr.f32.gmra.mxu0 %v186
    %v351 = vpop.f32.mrf.mxu0
    %v352 = vadd.f32 %v128, %v351
    %v353 = vpop.f32.mrf.mxu0
    %v354 = vadd.f32 %v132, %v353
    %355 = vmatprep.mubr.f32.mxu0 0.0
    %356 = vmatmul.mubr.f32.gmra.mxu0 %v189
    %v357 = vpop.f32.mrf.mxu0
    %v358 = vadd.f32 %v128, %v357
    %v359 = vpop.f32.mrf.mxu0
    %v360 = vadd.f32 %v132, %v359
    %361 = vmatprep.mubr.f32.mxu0 0.0
    %362 = vmatmul.mubr.f32.gmra.mxu0 %v192
    %v363 = vpop.f32.mrf.mxu0
    %v364 = vadd.f32 %v128, %v363
    %v365 = vpop.f32.mrf.mxu0
    %v366 = vadd.f32 %v132, %v365
    %367 = vdwg.mxu0
    %368 = vmatprep.subr.mxu0 0.0
    %369 = vmatpush1.msra.mxu0 0.0
    %370 = vmatprep.subr.mxu0 0.0
    %371 = vmatpush1.msra.mxu0 0.0
    %372 = vmatprep.subr.mxu0 0.0
    %373 = vmatpush1.msra.mxu0 0.0
    %374 = vmatprep.subr.mxu0 0.0
    %375 = vmatpush1.msra.mxu0 0.0
    %376 = vmatprep.subr.mxu0 0.0
    %377 = vmatpush1.msra.mxu0 0.0
    %378 = vmatprep.subr.mxu0 0.0
    %379 = vmatpush1.msra.mxu0 0.0
    %380 = vmatprep.subr.mxu0 0.0
    %381 = vmatpush1.msra.mxu0 0.0
    %382 = vmatprep.subr.mxu0 0.0
    %383 = vmatpush1.msra.mxu0 0.0
    %384 = vmatprep.subr.mxu0 0.0
    %385 = vmatpush1.msra.mxu0 0.0
    %386 = vmatprep.subr.mxu0 0.0
    %387 = vmatpush1.msra.mxu0 0.0
    %388 = vmatprep.subr.mxu0 0.0
    %389 = vmatpush1.msra.mxu0 0.0
    %390 = vmatprep.subr.mxu0 0.0
    %391 = vmatpush1.msra.mxu0 0.0
    %392 = vmatprep.subr.mxu0 0.0
    %393 = vmatpush1.msra.mxu0 0.0
    %394 = vmatprep.subr.mxu0 0.0
    %395 = vmatpush1.msra.mxu0 0.0
    %396 = vmatprep.subr.mxu0 %v205
    %397 = vmatpush1.msra.mxu0 %v202
    %398 = vmatprep.subr.mxu0 %v118
    %399 = vmatpush1.msra.mxu0 %v117
    %400 = vmatprep.subr.mxu0 0.0
    %401 = vmatpush2.msra.mxu0 0.0
    %402 = vmatprep.subr.mxu0 0.0
    %403 = vmatpush2.msra.mxu0 0.0
    %404 = vmatprep.subr.mxu0 0.0
    %405 = vmatpush2.msra.mxu0 0.0
    %406 = vmatprep.subr.mxu0 0.0
    %407 = vmatpush2.msra.mxu0 0.0
    %408 = vmatprep.subr.mxu0 0.0
    %409 = vmatpush2.msra.mxu0 0.0
    %410 = vmatprep.subr.mxu0 0.0
    %411 = vmatpush2.msra.mxu0 0.0
    %412 = vmatprep.subr.mxu0 0.0
    %413 = vmatpush2.msra.mxu0 0.0
    %414 = vmatprep.subr.mxu0 0.0
    %415 = vmatpush2.msra.mxu0 0.0
    %416 = vmatprep.subr.mxu0 0.0
    %417 = vmatpush2.msra.mxu0 0.0
    %418 = vmatprep.subr.mxu0 0.0
    %419 = vmatpush2.msra.mxu0 0.0
    %420 = vmatprep.subr.mxu0 0.0
    %421 = vmatpush2.msra.mxu0 0.0
    %422 = vmatprep.subr.mxu0 0.0
    %423 = vmatpush2.msra.mxu0 0.0
    %424 = vmatprep.subr.mxu0 0.0
    %425 = vmatpush2.msra.mxu0 0.0
    %426 = vmatprep.subr.mxu0 0.0
    %427 = vmatpush2.msra.mxu0 0.0
    %428 = vmatprep.subr.mxu0 0.0
    %429 = vmatpush2.msra.mxu0 0.0
    %430 = vmatprep.subr.mxu0 0.0
    %431 = vmatpush2.msra.mxu0 0.0
    %432 = vmatprep.mubr.f32.mxu0 0.0
    %433 = vmatmul.mubr.f32.gmra.mxu0 %v147
    %v434 = vpop.f32.mrf.mxu0
    %v435 = vadd.f32 %v136, %v434
    %v436 = vpop.f32.mrf.mxu0
    %v437 = vadd.f32 %v140, %v436
    %438 = vmatprep.mubr.f32.mxu0 0.0
    %439 = vmatmul.mubr.f32.gmra.mxu0 %v150
    %v440 = vpop.f32.mrf.mxu0
    %v441 = vadd.f32 %v136, %v440
    %v442 = vpop.f32.mrf.mxu0
    %v443 = vadd.f32 %v140, %v442
    %444 = vmatprep.mubr.f32.mxu0 0.0
    %445 = vmatmul.mubr.f32.gmra.mxu0 %v153
    %v446 = vpop.f32.mrf.mxu0
    %v447 = vadd.f32 %v136, %v446
    %v448 = vpop.f32.mrf.mxu0
    %v449 = vadd.f32 %v140, %v448
    %450 = vmatprep.mubr.f32.mxu0 0.0
    %451 = vmatmul.mubr.f32.gmra.mxu0 %v156
    %v452 = vpop.f32.mrf.mxu0
    %v453 = vadd.f32 %v136, %v452
    %v454 = vpop.f32.mrf.mxu0
    %v455 = vadd.f32 %v140, %v454
    %456 = vmatprep.mubr.f32.mxu0 0.0
    %457 = vmatmul.mubr.f32.gmra.mxu0 %v159
    %v458 = vpop.f32.mrf.mxu0
    %v459 = vadd.f32 %v136, %v458
    %v460 = vpop.f32.mrf.mxu0
    %v461 = vadd.f32 %v140, %v460
    %462 = vmatprep.mubr.f32.mxu0 0.0
    %463 = vmatmul.mubr.f32.gmra.mxu0 %v162
    %v464 = vpop.f32.mrf.mxu0
    %v465 = vadd.f32 %v136, %v464
    %v466 = vpop.f32.mrf.mxu0
    %v467 = vadd.f32 %v140, %v466
    %468 = vmatprep.mubr.f32.mxu0 0.0
    %469 = vmatmul.mubr.f32.gmra.mxu0 %v165
    %v470 = vpop.f32.mrf.mxu0
    %v471 = vadd.f32 %v136, %v470
    %v472 = vpop.f32.mrf.mxu0
    %v473 = vadd.f32 %v140, %v472
    %474 = vmatprep.mubr.f32.mxu0 0.0
    %475 = vmatmul.mubr.f32.gmra.mxu0 %v168
    %v476 = vpop.f32.mrf.mxu0
    %v477 = vadd.f32 %v136, %v476
    %v478 = vpop.f32.mrf.mxu0
    %v479 = vadd.f32 %v140, %v478
    %480 = vmatprep.mubr.f32.mxu0 0.0
    %481 = vmatmul.mubr.f32.gmra.mxu0 %v171
    %v482 = vpop.f32.mrf.mxu0
    %v483 = vadd.f32 %v136, %v482
    %v484 = vpop.f32.mrf.mxu0
    %v485 = vadd.f32 %v140, %v484
    %486 = vmatprep.mubr.f32.mxu0 0.0
    %487 = vmatmul.mubr.f32.gmra.mxu0 %v174
    %v488 = vpop.f32.mrf.mxu0
    %v489 = vadd.f32 %v136, %v488
    %v490 = vpop.f32.mrf.mxu0
    %v491 = vadd.f32 %v140, %v490
    %492 = vmatprep.mubr.f32.mxu0 0.0
    %493 = vmatmul.mubr.f32.gmra.mxu0 %v177
    %v494 = vpop.f32.mrf.mxu0
    %v495 = vadd.f32 %v136, %v494
    %v496 = vpop.f32.mrf.mxu0
    %v497 = vadd.f32 %v140, %v496
    %498 = vmatprep.mubr.f32.mxu0 0.0
    %499 = vmatmul.mubr.f32.gmra.mxu0 %v180
    %v500 = vpop.f32.mrf.mxu0
    %v501 = vadd.f32 %v136, %v500
    %v502 = vpop.f32.mrf.mxu0
    %v503 = vadd.f32 %v140, %v502
    %504 = vmatprep.mubr.f32.mxu0 0.0
    %505 = vmatmul.mubr.f32.gmra.mxu0 %v183
    %v506 = vpop.f32.mrf.mxu0
    %v507 = vadd.f32 %v136, %v506
    %v508 = vpop.f32.mrf.mxu0
    %v509 = vadd.f32 %v140, %v508
    %510 = vmatprep.mubr.f32.mxu0 0.0
    %511 = vmatmul.mubr.f32.gmra.mxu0 %v186
    %v512 = vpop.f32.mrf.mxu0
    %v513 = vadd.f32 %v136, %v512
    %v514 = vpop.f32.mrf.mxu0
    %v515 = vadd.f32 %v140, %v514
    %516 = vmatprep.mubr.f32.mxu0 0.0
    %517 = vmatmul.mubr.f32.gmra.mxu0 %v189
    %v518 = vpop.f32.mrf.mxu0
    %v519 = vadd.f32 %v136, %v518
    %v520 = vpop.f32.mrf.mxu0
    %v521 = vadd.f32 %v140, %v520
    %522 = vmatprep.mubr.f32.mxu0 0.0
    %523 = vmatmul.mubr.f32.gmra.mxu0 %v192
    %v524 = vpop.f32.mrf.mxu0
    %v525 = vadd.f32 %v136, %v524
    %v526 = vpop.f32.mrf.mxu0
    %v527 = vadd.f32 %v140, %v526
    %528 = vdwg.mxu0
    %529 = vst [vmem:[#allocation2] sm:$0xff] %v274
    %530 = vst [vmem:[#allocation2 + $0x8] sm:$0xff] %v276
    %531 = vst [vmem:[#allocation2 + $0x10] sm:$0xff] %v435
    %532 = vst [vmem:[#allocation2 + $0x18] sm:$0xff] %v437
    %533 = vst [vmem:[#allocation2 + $0x20] sm:$0xff] %v280
    %534 = vst [vmem:[#allocation2 + $0x28] sm:$0xff] %v282
    %535 = vst [vmem:[#allocation2 + $0x30] sm:$0xff] %v441
    %536 = vst [vmem:[#allocation2 + $0x38] sm:$0xff] %v443
    %537 = vst [vmem:[#allocation2 + $0x40] sm:$0xff] %v286
    %538 = vst [vmem:[#allocation2 + $0x48] sm:$0xff] %v288
    %539 = vst [vmem:[#allocation2 + $0x50] sm:$0xff] %v447
    %540 = vst [vmem:[#allocation2 + $0x58] sm:$0xff] %v449
    %541 = vst [vmem:[#allocation2 + $0x60] sm:$0xff] %v292
    %542 = vst [vmem:[#allocation2 + $0x68] sm:$0xff] %v294
    %543 = vst [vmem:[#allocation2 + $0x70] sm:$0xff] %v453
    %544 = vst [vmem:[#allocation2 + $0x78] sm:$0xff] %v455
    %545 = vst [vmem:[#allocation2 + $0x80] sm:$0xff] %v298
    %546 = vst [vmem:[#allocation2 + $0x88] sm:$0xff] %v300
    %547 = vst [vmem:[#allocation2 + $0x90] sm:$0xff] %v459
    %548 = vst [vmem:[#allocation2 + $0x98] sm:$0xff] %v461
    %549 = vst [vmem:[#allocation2 + $0xa0] sm:$0xff] %v304
    %550 = vst [vmem:[#allocation2 + $0xa8] sm:$0xff] %v306
    %551 = vst [vmem:[#allocation2 + $0xb0] sm:$0xff] %v465
    %552 = vst [vmem:[#allocation2 + $0xb8] sm:$0xff] %v467
    %553 = vst [vmem:[#allocation2 + $0xc0] sm:$0xff] %v310
    %554 = vst [vmem:[#allocation2 + $0xc8] sm:$0xff] %v312
    %555 = vst [vmem:[#allocation2 + $0xd0] sm:$0xff] %v471
    %556 = vst [vmem:[#allocation2 + $0xd8] sm:$0xff] %v473
    %557 = vst [vmem:[#allocation2 + $0xe0] sm:$0xff] %v316
    %558 = vst [vmem:[#allocation2 + $0xe8] sm:$0xff] %v318
    %559 = vst [vmem:[#allocation2 + $0xf0] sm:$0xff] %v477
    %560 = vst [vmem:[#allocation2 + $0xf8] sm:$0xff] %v479
    %561 = vst [vmem:[#allocation2 + $0x100] sm:$0xff] %v322
    %562 = vst [vmem:[#allocation2 + $0x108] sm:$0xff] %v324
    %563 = vst [vmem:[#allocation2 + $0x110] sm:$0xff] %v483
    %564 = vst [vmem:[#allocation2 + $0x118] sm:$0xff] %v485
    %565 = vst [vmem:[#allocation2 + $0x120] sm:$0xff] %v328
    %566 = vst [vmem:[#allocation2 + $0x128] sm:$0xff] %v330
    %567 = vst [vmem:[#allocation2 + $0x130] sm:$0xff] %v489
    %568 = vst [vmem:[#allocation2 + $0x138] sm:$0xff] %v491
    %569 = vst [vmem:[#allocation2 + $0x140] sm:$0xff] %v334
    %570 = vst [vmem:[#allocation2 + $0x148] sm:$0xff] %v336
    %571 = vst [vmem:[#allocation2 + $0x150] sm:$0xff] %v495
    %572 = vst [vmem:[#allocation2 + $0x158] sm:$0xff] %v497
    %573 = vst [vmem:[#allocation2 + $0x160] sm:$0xff] %v340
    %574 = vst [vmem:[#allocation2 + $0x168] sm:$0xff] %v342
    %575 = vst [vmem:[#allocation2 + $0x170] sm:$0xff] %v501
    %576 = vst [vmem:[#allocation2 + $0x178] sm:$0xff] %v503
    %577 = vst [vmem:[#allocation2 + $0x180] sm:$0xff] %v346
    %578 = vst [vmem:[#allocation2 + $0x188] sm:$0xff] %v348
    %579 = vst [vmem:[#allocation2 + $0x190] sm:$0xff] %v507
    %580 = vst [vmem:[#allocation2 + $0x198] sm:$0xff] %v509
    %581 = vst [vmem:[#allocation2 + $0x1a0] sm:$0xff] %v352
    %582 = vst [vmem:[#allocation2 + $0x1a8] sm:$0xff] %v354
    %583 = vst [vmem:[#allocation2 + $0x1b0] sm:$0xff] %v513
    %584 = vst [vmem:[#allocation2 + $0x1b8] sm:$0xff] %v515
    %585 = vst [vmem:[#allocation2 + $0x1c0] sm:$0xff] %v358
    %586 = vst [vmem:[#allocation2 + $0x1c8] sm:$0xff] %v360
    %587 = vst [vmem:[#allocation2 + $0x1d0] sm:$0xff] %v519
    %588 = vst [vmem:[#allocation2 + $0x1d8] sm:$0xff] %v521
    %589 = vst [vmem:[#allocation2 + $0x1e0] sm:$0xff] %v364
    %590 = vst [vmem:[#allocation2 + $0x1e8] sm:$0xff] %v366
    %591 = vst [vmem:[#allocation2 + $0x1f0] sm:$0xff] %v525
    %592 = vst [vmem:[#allocation2 + $0x1f8] sm:$0xff] %v527
    %v593 = vld [vmem:[#allocation2] sm:$0xff]
    %v594 = vld [vmem:[#allocation2 + $0x20] sm:$0xff]
    %v595 = vld [vmem:[#allocation2 + $0x40] sm:$0xff]
    %v596 = vld [vmem:[#allocation2 + $0x60] sm:$0xff]
    %v597 = vld [vmem:[#allocation2 + $0x80] sm:$0xff]
    %v598 = vld [vmem:[#allocation2 + $0xa0] sm:$0xff]
    %v599 = vld [vmem:[#allocation2 + $0xc0] sm:$0xff]
    %v600 = vld [vmem:[#allocation2 + $0xe0] sm:$0xff]
    %v601 = vld [vmem:[#allocation2 + $0x100] sm:$0xff]
    %v602 = vld [vmem:[#allocation2 + $0x120] sm:$0xff]
    %v603 = vld [vmem:[#allocation2 + $0x140] sm:$0xff]
    %v604 = vld [vmem:[#allocation2 + $0x160] sm:$0xff]
    %v605 = vld [vmem:[#allocation2 + $0x180] sm:$0xff]
    %v606 = vld [vmem:[#allocation2 + $0x1a0] sm:$0xff]
    %v607 = vld [vmem:[#allocation2 + $0x1c0] sm:$0xff]
    %v608 = vld [vmem:[#allocation2 + $0x1e0] sm:$0xff]
    %v609 = vmax.f32 %v593, 0.0
    %v610 = vmax.f32 %v594, 0.0
    %v611 = vmax.f32 %v595, 0.0
    %v612 = vmax.f32 %v596, 0.0
    %v613 = vmax.f32 %v597, 0.0
    %v614 = vmax.f32 %v598, 0.0
    %v615 = vmax.f32 %v599, 0.0
    %v616 = vmax.f32 %v600, 0.0
    %v617 = vmax.f32 %v601, 0.0
    %v618 = vmax.f32 %v602, 0.0
    %v619 = vmax.f32 %v603, 0.0
    %v620 = vmax.f32 %v604, 0.0
    %v621 = vmax.f32 %v605, 0.0
    %v622 = vmax.f32 %v606, 0.0
    %v623 = vmax.f32 %v607, 0.0
    %v624 = vmax.f32 %v608, 0.0
    %v625 = vld [vmem:[#allocation9] sm:$0xff]
    %v626 = vld [vmem:[#allocation9 + $0x8] sm:$0xff]
    %v627 = vld [vmem:[#allocation9 + $0x10] sm:$0xff]
    %v628 = vld [vmem:[#allocation9 + $0x18] sm:$0xff]
    %v629 = vld [vmem:[#allocation9 + $0x20] sm:$0xff]
    %v630 = vld [vmem:[#allocation9 + $0x28] sm:$0xff]
    %v631 = vld [vmem:[#allocation9 + $0x30] sm:$0xff]
    %v632 = vld [vmem:[#allocation9 + $0x38] sm:$0xff]
    %v633 = vld [vmem:[#allocation9 + $0x40] sm:$0xff]
    %v634 = vld [vmem:[#allocation9 + $0x48] sm:$0xff]
    %v635 = vld [vmem:[#allocation9 + $0x50] sm:$0xff]
    %v636 = vld [vmem:[#allocation9 + $0x58] sm:$0xff]
    %v637 = vld [vmem:[#allocation9 + $0x60] sm:$0xff]
    %v638 = vld [vmem:[#allocation9 + $0x68] sm:$0xff]
    %v639 = vld [vmem:[#allocation9 + $0x70] sm:$0xff]
    %v640 = vld [vmem:[#allocation9 + $0x78] sm:$0xff]
    %v641 = vld [vmem:[#allocation2 + $0x8] sm:$0xff]
    %v642 = vld [vmem:[#allocation2 + $0x28] sm:$0xff]
    %v643 = vld [vmem:[#allocation2 + $0x48] sm:$0xff]
    %v644 = vld [vmem:[#allocation2 + $0x68] sm:$0xff]
    %v645 = vld [vmem:[#allocation2 + $0x88] sm:$0xff]
    %v646 = vld [vmem:[#allocation2 + $0xa8] sm:$0xff]
    %v647 = vld [vmem:[#allocation2 + $0xc8] sm:$0xff]
    %v648 = vld [vmem:[#allocation2 + $0xe8] sm:$0xff]
    %v649 = vld [vmem:[#allocation2 + $0x108] sm:$0xff]
    %v650 = vld [vmem:[#allocation2 + $0x128] sm:$0xff]
    %v651 = vld [vmem:[#allocation2 + $0x148] sm:$0xff]
    %v652 = vld [vmem:[#allocation2 + $0x168] sm:$0xff]
    %v653 = vld [vmem:[#allocation2 + $0x188] sm:$0xff]
    %v654 = vld [vmem:[#allocation2 + $0x1a8] sm:$0xff]
    %v655 = vld [vmem:[#allocation2 + $0x1c8] sm:$0xff]
    %v656 = vld [vmem:[#allocation2 + $0x1e8] sm:$0xff]
    %657 = vmatprep.subr.mxu0 0.0
    %658 = vmatpush1.msra.mxu0 %v640
    %659 = vmatprep.subr.mxu0 0.0
    %660 = vmatpush1.msra.mxu0 %v639
    %661 = vmatprep.subr.mxu0 0.0
    %662 = vmatpush1.msra.mxu0 %v638
    %663 = vmatprep.subr.mxu0 0.0
    %664 = vmatpush1.msra.mxu0 %v637
    %665 = vmatprep.subr.mxu0 0.0
    %666 = vmatpush1.msra.mxu0 %v636
    %667 = vmatprep.subr.mxu0 0.0
    %668 = vmatpush1.msra.mxu0 %v635
    %669 = vmatprep.subr.mxu0 0.0
    %670 = vmatpush1.msra.mxu0 %v634
    %671 = vmatprep.subr.mxu0 0.0
    %672 = vmatpush1.msra.mxu0 %v633
    %673 = vmatprep.subr.mxu0 0.0
    %674 = vmatpush1.msra.mxu0 %v632
    %675 = vmatprep.subr.mxu0 0.0
    %676 = vmatpush1.msra.mxu0 %v631
    %677 = vmatprep.subr.mxu0 0.0
    %678 = vmatpush1.msra.mxu0 %v630
    %679 = vmatprep.subr.mxu0 0.0
    %680 = vmatpush1.msra.mxu0 %v629
    %681 = vmatprep.subr.mxu0 0.0
    %682 = vmatpush1.msra.mxu0 %v628
    %683 = vmatprep.subr.mxu0 0.0
    %684 = vmatpush1.msra.mxu0 %v627
    %685 = vmatprep.subr.mxu0 0.0
    %686 = vmatpush1.msra.mxu0 %v626
    %687 = vmatprep.subr.mxu0 0.0
    %688 = vmatpush1.msra.mxu0 %v625
    %689 = vmatprep.subr.mxu0 0.0
    %690 = vmatpush2.msra.mxu0 0.0
    %691 = vmatprep.subr.mxu0 0.0
    %692 = vmatpush2.msra.mxu0 0.0
    %693 = vmatprep.subr.mxu0 0.0
    %694 = vmatpush2.msra.mxu0 0.0
    %695 = vmatprep.subr.mxu0 0.0
    %696 = vmatpush2.msra.mxu0 0.0
    %697 = vmatprep.subr.mxu0 0.0
    %698 = vmatpush2.msra.mxu0 0.0
    %699 = vmatprep.subr.mxu0 0.0
    %700 = vmatpush2.msra.mxu0 0.0
    %701 = vmatprep.subr.mxu0 0.0
    %702 = vmatpush2.msra.mxu0 0.0
    %703 = vmatprep.subr.mxu0 0.0
    %704 = vmatpush2.msra.mxu0 0.0
    %705 = vmatprep.subr.mxu0 0.0
    %706 = vmatpush2.msra.mxu0 0.0
    %707 = vmatprep.subr.mxu0 0.0
    %708 = vmatpush2.msra.mxu0 0.0
    %709 = vmatprep.subr.mxu0 0.0
    %710 = vmatpush2.msra.mxu0 0.0
    %711 = vmatprep.subr.mxu0 0.0
    %712 = vmatpush2.msra.mxu0 0.0
    %713 = vmatprep.subr.mxu0 0.0
    %714 = vmatpush2.msra.mxu0 0.0
    %715 = vmatprep.subr.mxu0 0.0
    %716 = vmatpush2.msra.mxu0 0.0
    %717 = vmatprep.subr.mxu0 0.0
    %718 = vmatpush2.msra.mxu0 0.0
    %719 = vmatprep.subr.mxu0 0.0
    %720 = vmatpush2.msra.mxu0 0.0
    %721 = vmatprep.mubr.f32.mxu0 0.0
    %722 = vmatmul.mubr.f32.gmra.mxu0 %v609
    %v723 = vpop.f32.mrf.mxu0
    %v724 = vadd.f32 %v641, %v723
    %v725 = vpop.f32.mrf.mxu0
    %726 = vmatprep.mubr.f32.mxu0 0.0
    %727 = vmatmul.mubr.f32.gmra.mxu0 %v610
    %v728 = vpop.f32.mrf.mxu0
    %v729 = vadd.f32 %v642, %v728
    %v730 = vpop.f32.mrf.mxu0
    %731 = vmatprep.mubr.f32.mxu0 0.0
    %732 = vmatmul.mubr.f32.gmra.mxu0 %v611
    %v733 = vpop.f32.mrf.mxu0
    %v734 = vadd.f32 %v643, %v733
    %v735 = vpop.f32.mrf.mxu0
    %736 = vmatprep.mubr.f32.mxu0 0.0
    %737 = vmatmul.mubr.f32.gmra.mxu0 %v612
    %v738 = vpop.f32.mrf.mxu0
    %v739 = vadd.f32 %v644, %v738
    %v740 = vpop.f32.mrf.mxu0
    %741 = vmatprep.mubr.f32.mxu0 0.0
    %742 = vmatmul.mubr.f32.gmra.mxu0 %v613
    %v743 = vpop.f32.mrf.mxu0
    %v744 = vadd.f32 %v645, %v743
    %v745 = vpop.f32.mrf.mxu0
    %746 = vmatprep.mubr.f32.mxu0 0.0
    %747 = vmatmul.mubr.f32.gmra.mxu0 %v614
    %v748 = vpop.f32.mrf.mxu0
    %v749 = vadd.f32 %v646, %v748
    %v750 = vpop.f32.mrf.mxu0
    %751 = vmatprep.mubr.f32.mxu0 0.0
    %752 = vmatmul.mubr.f32.gmra.mxu0 %v615
    %v753 = vpop.f32.mrf.mxu0
    %v754 = vadd.f32 %v647, %v753
    %v755 = vpop.f32.mrf.mxu0
    %756 = vmatprep.mubr.f32.mxu0 0.0
    %757 = vmatmul.mubr.f32.gmra.mxu0 %v616
    %v758 = vpop.f32.mrf.mxu0
    %v759 = vadd.f32 %v648, %v758
    %v760 = vpop.f32.mrf.mxu0
    %761 = vmatprep.mubr.f32.mxu0 0.0
    %762 = vmatmul.mubr.f32.gmra.mxu0 %v617
    %v763 = vpop.f32.mrf.mxu0
    %v764 = vadd.f32 %v649, %v763
    %v765 = vpop.f32.mrf.mxu0
    %766 = vmatprep.mubr.f32.mxu0 0.0
    %767 = vmatmul.mubr.f32.gmra.mxu0 %v618
    %v768 = vpop.f32.mrf.mxu0
    %v769 = vadd.f32 %v650, %v768
    %v770 = vpop.f32.mrf.mxu0
    %771 = vmatprep.mubr.f32.mxu0 0.0
    %772 = vmatmul.mubr.f32.gmra.mxu0 %v619
    %v773 = vpop.f32.mrf.mxu0
    %v774 = vadd.f32 %v651, %v773
    %v775 = vpop.f32.mrf.mxu0
    %776 = vmatprep.mubr.f32.mxu0 0.0
    %777 = vmatmul.mubr.f32.gmra.mxu0 %v620
    %v778 = vpop.f32.mrf.mxu0
    %v779 = vadd.f32 %v652, %v778
    %v780 = vpop.f32.mrf.mxu0
    %781 = vmatprep.mubr.f32.mxu0 0.0
    %782 = vmatmul.mubr.f32.gmra.mxu0 %v621
    %v783 = vpop.f32.mrf.mxu0
    %v784 = vadd.f32 %v653, %v783
    %v785 = vpop.f32.mrf.mxu0
    %786 = vmatprep.mubr.f32.mxu0 0.0
    %787 = vmatmul.mubr.f32.gmra.mxu0 %v622
    %v788 = vpop.f32.mrf.mxu0
    %v789 = vadd.f32 %v654, %v788
    %v790 = vpop.f32.mrf.mxu0
    %791 = vmatprep.mubr.f32.mxu0 0.0
    %792 = vmatmul.mubr.f32.gmra.mxu0 %v623
    %v793 = vpop.f32.mrf.mxu0
    %v794 = vadd.f32 %v655, %v793
    %v795 = vpop.f32.mrf.mxu0
    %796 = vmatprep.mubr.f32.mxu0 0.0
    %797 = vmatmul.mubr.f32.gmra.mxu0 %v624
    %v798 = vpop.f32.mrf.mxu0
    %v799 = vadd.f32 %v656, %v798
    %v800 = vpop.f32.mrf.mxu0
    %801 = vdwg.mxu0
    %v802 = vmax.f32 %v724, 0.0
    %v803 = vmax.f32 %v729, 0.0
    %v804 = vmax.f32 %v734, 0.0
    %v805 = vmax.f32 %v739, 0.0
    %v806 = vmax.f32 %v744, 0.0
    %v807 = vmax.f32 %v749, 0.0
    %v808 = vmax.f32 %v754, 0.0
    %v809 = vmax.f32 %v759, 0.0
    %v810 = vmax.f32 %v764, 0.0
    %v811 = vmax.f32 %v769, 0.0
    %v812 = vmax.f32 %v774, 0.0
    %v813 = vmax.f32 %v779, 0.0
    %v814 = vmax.f32 %v784, 0.0
    %v815 = vmax.f32 %v789, 0.0
    %v816 = vmax.f32 %v794, 0.0
    %v817 = vmax.f32 %v799, 0.0
    %v818 = vld [vmem:[#allocation10] sm:$0xff]
    %v819 = vld [vmem:[#allocation10 + $0x8] sm:$0xff]
    %v820 = vld [vmem:[#allocation10 + $0x10] sm:$0xff]
    %v821 = vld [vmem:[#allocation10 + $0x18] sm:$0xff]
    %v822 = vld [vmem:[#allocation10 + $0x20] sm:$0xff]
    %v823 = vld [vmem:[#allocation10 + $0x28] sm:$0xff]
    %v824 = vld [vmem:[#allocation10 + $0x30] sm:$0xff]
    %v825 = vld [vmem:[#allocation10 + $0x38] sm:$0xff]
    %v826 = vld [vmem:[#allocation10 + $0x40] sm:$0xff]
    %v827 = vld [vmem:[#allocation10 + $0x48] sm:$0xff]
    %v828 = vld [vmem:[#allocation10 + $0x50] sm:$0xff]
    %v829 = vld [vmem:[#allocation10 + $0x58] sm:$0xff]
    %v830 = vld [vmem:[#allocation10 + $0x60] sm:$0xff]
    %v831 = vld [vmem:[#allocation10 + $0x68] sm:$0xff]
    %v832 = vld [vmem:[#allocation10 + $0x70] sm:$0xff]
    %v833 = vld [vmem:[#allocation10 + $0x78] sm:$0xff]
    %v834 = vld [vmem:[#allocation2 + $0x10] sm:$0xff]
    %v835 = vld [vmem:[#allocation2 + $0x30] sm:$0xff]
    %v836 = vld [vmem:[#allocation2 + $0x50] sm:$0xff]
    %v837 = vld [vmem:[#allocation2 + $0x70] sm:$0xff]
    %v838 = vld [vmem:[#allocation2 + $0x90] sm:$0xff]
    %v839 = vld [vmem:[#allocation2 + $0xb0] sm:$0xff]
    %v840 = vld [vmem:[#allocation2 + $0xd0] sm:$0xff]
    %v841 = vld [vmem:[#allocation2 + $0xf0] sm:$0xff]
    %v842 = vld [vmem:[#allocation2 + $0x110] sm:$0xff]
    %v843 = vld [vmem:[#allocation2 + $0x130] sm:$0xff]
    %v844 = vld [vmem:[#allocation2 + $0x150] sm:$0xff]
    %v845 = vld [vmem:[#allocation2 + $0x170] sm:$0xff]
    %v846 = vld [vmem:[#allocation2 + $0x190] sm:$0xff]
    %v847 = vld [vmem:[#allocation2 + $0x1b0] sm:$0xff]
    %v848 = vld [vmem:[#allocation2 + $0x1d0] sm:$0xff]
    %v849 = vld [vmem:[#allocation2 + $0x1f0] sm:$0xff]
    %850 = vmatprep.subr.mxu0 0.0
    %851 = vmatpush1.msra.mxu0 %v833
    %852 = vmatprep.subr.mxu0 0.0
    %853 = vmatpush1.msra.mxu0 %v832
    %854 = vmatprep.subr.mxu0 0.0
    %855 = vmatpush1.msra.mxu0 %v831
    %856 = vmatprep.subr.mxu0 0.0
    %857 = vmatpush1.msra.mxu0 %v830
    %858 = vmatprep.subr.mxu0 0.0
    %859 = vmatpush1.msra.mxu0 %v829
    %860 = vmatprep.subr.mxu0 0.0
    %861 = vmatpush1.msra.mxu0 %v828
    %862 = vmatprep.subr.mxu0 0.0
    %863 = vmatpush1.msra.mxu0 %v827
    %864 = vmatprep.subr.mxu0 0.0
    %865 = vmatpush1.msra.mxu0 %v826
    %866 = vmatprep.subr.mxu0 0.0
    %867 = vmatpush1.msra.mxu0 %v825
    %868 = vmatprep.subr.mxu0 0.0
    %869 = vmatpush1.msra.mxu0 %v824
    %870 = vmatprep.subr.mxu0 0.0
    %871 = vmatpush1.msra.mxu0 %v823
    %872 = vmatprep.subr.mxu0 0.0
    %873 = vmatpush1.msra.mxu0 %v822
    %874 = vmatprep.subr.mxu0 0.0
    %875 = vmatpush1.msra.mxu0 %v821
    %876 = vmatprep.subr.mxu0 0.0
    %877 = vmatpush1.msra.mxu0 %v820
    %878 = vmatprep.subr.mxu0 0.0
    %879 = vmatpush1.msra.mxu0 %v819
    %880 = vmatprep.subr.mxu0 0.0
    %881 = vmatpush1.msra.mxu0 %v818
    %882 = vmatprep.subr.mxu0 0.0
    %883 = vmatpush2.msra.mxu0 0.0
    %884 = vmatprep.subr.mxu0 0.0
    %885 = vmatpush2.msra.mxu0 0.0
    %886 = vmatprep.subr.mxu0 0.0
    %887 = vmatpush2.msra.mxu0 0.0
    %888 = vmatprep.subr.mxu0 0.0
    %889 = vmatpush2.msra.mxu0 0.0
    %890 = vmatprep.subr.mxu0 0.0
    %891 = vmatpush2.msra.mxu0 0.0
    %892 = vmatprep.subr.mxu0 0.0
    %893 = vmatpush2.msra.mxu0 0.0
    %894 = vmatprep.subr.mxu0 0.0
    %895 = vmatpush2.msra.mxu0 0.0
    %896 = vmatprep.subr.mxu0 0.0
    %897 = vmatpush2.msra.mxu0 0.0
    %898 = vmatprep.subr.mxu0 0.0
    %899 = vmatpush2.msra.mxu0 0.0
    %900 = vmatprep.subr.mxu0 0.0
    %901 = vmatpush2.msra.mxu0 0.0
    %902 = vmatprep.subr.mxu0 0.0
    %903 = vmatpush2.msra.mxu0 0.0
    %904 = vmatprep.subr.mxu0 0.0
    %905 = vmatpush2.msra.mxu0 0.0
    %906 = vmatprep.subr.mxu0 0.0
    %907 = vmatpush2.msra.mxu0 0.0
    %908 = vmatprep.subr.mxu0 0.0
    %909 = vmatpush2.msra.mxu0 0.0
    %910 = vmatprep.subr.mxu0 0.0
    %911 = vmatpush2.msra.mxu0 0.0
    %912 = vmatprep.subr.mxu0 0.0
    %913 = vmatpush2.msra.mxu0 0.0
    %914 = vmatprep.mubr.f32.mxu0 0.0
    %915 = vmatmul.mubr.f32.gmra.mxu0 %v802
    %v916 = vpop.f32.mrf.mxu0
    %v917 = vadd.f32 %v834, %v916
    %v918 = vpop.f32.mrf.mxu0
    %919 = vmatprep.mubr.f32.mxu0 0.0
    %920 = vmatmul.mubr.f32.gmra.mxu0 %v803
    %v921 = vpop.f32.mrf.mxu0
    %v922 = vadd.f32 %v835, %v921
    %v923 = vpop.f32.mrf.mxu0
    %924 = vmatprep.mubr.f32.mxu0 0.0
    %925 = vmatmul.mubr.f32.gmra.mxu0 %v804
    %v926 = vpop.f32.mrf.mxu0
    %v927 = vadd.f32 %v836, %v926
    %v928 = vpop.f32.mrf.mxu0
    %929 = vmatprep.mubr.f32.mxu0 0.0
    %930 = vmatmul.mubr.f32.gmra.mxu0 %v805
    %v931 = vpop.f32.mrf.mxu0
    %v932 = vadd.f32 %v837, %v931
    %v933 = vpop.f32.mrf.mxu0
    %934 = vmatprep.mubr.f32.mxu0 0.0
    %935 = vmatmul.mubr.f32.gmra.mxu0 %v806
    %v936 = vpop.f32.mrf.mxu0
    %v937 = vadd.f32 %v838, %v936
    %v938 = vpop.f32.mrf.mxu0
    %939 = vmatprep.mubr.f32.mxu0 0.0
    %940 = vmatmul.mubr.f32.gmra.mxu0 %v807
    %v941 = vpop.f32.mrf.mxu0
    %v942 = vadd.f32 %v839, %v941
    %v943 = vpop.f32.mrf.mxu0
    %944 = vmatprep.mubr.f32.mxu0 0.0
    %945 = vmatmul.mubr.f32.gmra.mxu0 %v808
    %v946 = vpop.f32.mrf.mxu0
    %v947 = vadd.f32 %v840, %v946
    %v948 = vpop.f32.mrf.mxu0
    %949 = vmatprep.mubr.f32.mxu0 0.0
    %950 = vmatmul.mubr.f32.gmra.mxu0 %v809
    %v951 = vpop.f32.mrf.mxu0
    %v952 = vadd.f32 %v841, %v951
    %v953 = vpop.f32.mrf.mxu0
    %954 = vmatprep.mubr.f32.mxu0 0.0
    %955 = vmatmul.mubr.f32.gmra.mxu0 %v810
    %v956 = vpop.f32.mrf.mxu0
    %v957 = vadd.f32 %v842, %v956
    %v958 = vpop.f32.mrf.mxu0
    %959 = vmatprep.mubr.f32.mxu0 0.0
    %960 = vmatmul.mubr.f32.gmra.mxu0 %v811
    %v961 = vpop.f32.mrf.mxu0
    %v962 = vadd.f32 %v843, %v961
    %v963 = vpop.f32.mrf.mxu0
    %964 = vmatprep.mubr.f32.mxu0 0.0
    %965 = vmatmul.mubr.f32.gmra.mxu0 %v812
    %v966 = vpop.f32.mrf.mxu0
    %v967 = vadd.f32 %v844, %v966
    %v968 = vpop.f32.mrf.mxu0
    %969 = vmatprep.mubr.f32.mxu0 0.0
    %970 = vmatmul.mubr.f32.gmra.mxu0 %v813
    %v971 = vpop.f32.mrf.mxu0
    %v972 = vadd.f32 %v845, %v971
    %v973 = vpop.f32.mrf.mxu0
    %974 = vmatprep.mubr.f32.mxu0 0.0
    %975 = vmatmul.mubr.f32.gmra.mxu0 %v814
    %v976 = vpop.f32.mrf.mxu0
    %v977 = vadd.f32 %v846, %v976
    %v978 = vpop.f32.mrf.mxu0
    %979 = vmatprep.mubr.f32.mxu0 0.0
    %980 = vmatmul.mubr.f32.gmra.mxu0 %v815
    %v981 = vpop.f32.mrf.mxu0
    %v982 = vadd.f32 %v847, %v981
    %v983 = vpop.f32.mrf.mxu0
    %984 = vmatprep.mubr.f32.mxu0 0.0
    %985 = vmatmul.mubr.f32.gmra.mxu0 %v816
    %v986 = vpop.f32.mrf.mxu0
    %v987 = vadd.f32 %v848, %v986
    %v988 = vpop.f32.mrf.mxu0
    %989 = vmatprep.mubr.f32.mxu0 0.0
    %990 = vmatmul.mubr.f32.gmra.mxu0 %v817
    %v991 = vpop.f32.mrf.mxu0
    %v992 = vadd.f32 %v849, %v991
    %v993 = vpop.f32.mrf.mxu0
    %994 = vdwg.mxu0
    %v995 = vmax.f32 %v917, 0.0
    %v996 = vmax.f32 %v922, 0.0
    %v997 = vmax.f32 %v927, 0.0
    %v998 = vmax.f32 %v932, 0.0
    %v999 = vmax.f32 %v937, 0.0
    %v1000 = vmax.f32 %v942, 0.0
    %v1001 = vmax.f32 %v947, 0.0
    %v1002 = vmax.f32 %v952, 0.0
    %v1003 = vmax.f32 %v957, 0.0
    %v1004 = vmax.f32 %v962, 0.0
    %v1005 = vmax.f32 %v967, 0.0
    %v1006 = vmax.f32 %v972, 0.0
    %v1007 = vmax.f32 %v977, 0.0
    %v1008 = vmax.f32 %v982, 0.0
    %v1009 = vmax.f32 %v987, 0.0
    %v1010 = vmax.f32 %v992, 0.0
    %v1011 = vld [vmem:[#allocation12] sm:$0xff]
    %v1012 = vld [vmem:[#allocation12 + $0x8] sm:$0xff]
    %v1013 = vld [vmem:[#allocation12 + $0x10] sm:$0xff]
    %v1014 = vld [vmem:[#allocation12 + $0x18] sm:$0xff]
    %v1015 = vld [vmem:[#allocation12 + $0x20] sm:$0xff]
    %v1016 = vld [vmem:[#allocation12 + $0x28] sm:$0xff]
    %v1017 = vld [vmem:[#allocation12 + $0x30] sm:$0xff]
    %v1018 = vld [vmem:[#allocation12 + $0x38] sm:$0xff]
    %v1019 = vld [vmem:[#allocation12 + $0x40] sm:$0xff]
    %v1020 = vld [vmem:[#allocation12 + $0x48] sm:$0xff]
    %v1021 = vld [vmem:[#allocation12 + $0x50] sm:$0xff]
    %v1022 = vld [vmem:[#allocation12 + $0x58] sm:$0xff]
    %v1023 = vld [vmem:[#allocation12 + $0x60] sm:$0xff]
    %v1024 = vld [vmem:[#allocation12 + $0x68] sm:$0xff]
    %v1025 = vld [vmem:[#allocation12 + $0x70] sm:$0xff]
    %v1026 = vld [vmem:[#allocation12 + $0x78] sm:$0xff]
    %v1027 = vld [vmem:[#allocation2 + $0x18] sm:$0xff]
    %v1028 = vld [vmem:[#allocation2 + $0x38] sm:$0xff]
    %v1029 = vld [vmem:[#allocation2 + $0x58] sm:$0xff]
    %v1030 = vld [vmem:[#allocation2 + $0x78] sm:$0xff]
    %v1031 = vld [vmem:[#allocation2 + $0x98] sm:$0xff]
    %v1032 = vld [vmem:[#allocation2 + $0xb8] sm:$0xff]
    %v1033 = vld [vmem:[#allocation2 + $0xd8] sm:$0xff]
    %v1034 = vld [vmem:[#allocation2 + $0xf8] sm:$0xff]
    %v1035 = vld [vmem:[#allocation2 + $0x118] sm:$0xff]
    %v1036 = vld [vmem:[#allocation2 + $0x138] sm:$0xff]
    %v1037 = vld [vmem:[#allocation2 + $0x158] sm:$0xff]
    %v1038 = vld [vmem:[#allocation2 + $0x178] sm:$0xff]
    %v1039 = vld [vmem:[#allocation2 + $0x198] sm:$0xff]
    %v1040 = vld [vmem:[#allocation2 + $0x1b8] sm:$0xff]
    %v1041 = vld [vmem:[#allocation2 + $0x1d8] sm:$0xff]
    %v1042 = vld [vmem:[#allocation2 + $0x1f8] sm:$0xff]
    %1043 = vmatprep.subr.mxu0 0.0
    %1044 = vmatpush1.msra.mxu0 %v1026
    %1045 = vmatprep.subr.mxu0 0.0
    %1046 = vmatpush1.msra.mxu0 %v1025
    %1047 = vmatprep.subr.mxu0 0.0
    %1048 = vmatpush1.msra.mxu0 %v1024
    %1049 = vmatprep.subr.mxu0 0.0
    %1050 = vmatpush1.msra.mxu0 %v1023
    %1051 = vmatprep.subr.mxu0 0.0
    %1052 = vmatpush1.msra.mxu0 %v1022
    %1053 = vmatprep.subr.mxu0 0.0
    %1054 = vmatpush1.msra.mxu0 %v1021
    %1055 = vmatprep.subr.mxu0 0.0
    %1056 = vmatpush1.msra.mxu0 %v1020
    %1057 = vmatprep.subr.mxu0 0.0
    %1058 = vmatpush1.msra.mxu0 %v1019
    %1059 = vmatprep.subr.mxu0 0.0
    %1060 = vmatpush1.msra.mxu0 %v1018
    %1061 = vmatprep.subr.mxu0 0.0
    %1062 = vmatpush1.msra.mxu0 %v1017
    %1063 = vmatprep.subr.mxu0 0.0
    %1064 = vmatpush1.msra.mxu0 %v1016
    %1065 = vmatprep.subr.mxu0 0.0
    %1066 = vmatpush1.msra.mxu0 %v1015
    %1067 = vmatprep.subr.mxu0 0.0
    %1068 = vmatpush1.msra.mxu0 %v1014
    %1069 = vmatprep.subr.mxu0 0.0
    %1070 = vmatpush1.msra.mxu0 %v1013
    %1071 = vmatprep.subr.mxu0 0.0
    %1072 = vmatpush1.msra.mxu0 %v1012
    %1073 = vmatprep.subr.mxu0 0.0
    %1074 = vmatpush1.msra.mxu0 %v1011
    %1075 = vmatprep.subr.mxu0 0.0
    %1076 = vmatpush2.msra.mxu0 0.0
    %1077 = vmatprep.subr.mxu0 0.0
    %1078 = vmatpush2.msra.mxu0 0.0
    %1079 = vmatprep.subr.mxu0 0.0
    %1080 = vmatpush2.msra.mxu0 0.0
    %1081 = vmatprep.subr.mxu0 0.0
    %1082 = vmatpush2.msra.mxu0 0.0
    %1083 = vmatprep.subr.mxu0 0.0
    %1084 = vmatpush2.msra.mxu0 0.0
    %1085 = vmatprep.subr.mxu0 0.0
    %1086 = vmatpush2.msra.mxu0 0.0
    %1087 = vmatprep.subr.mxu0 0.0
    %1088 = vmatpush2.msra.mxu0 0.0
    %1089 = vmatprep.subr.mxu0 0.0
    %1090 = vmatpush2.msra.mxu0 0.0
    %1091 = vmatprep.subr.mxu0 0.0
    %1092 = vmatpush2.msra.mxu0 0.0
    %1093 = vmatprep.subr.mxu0 0.0
    %1094 = vmatpush2.msra.mxu0 0.0
    %1095 = vmatprep.subr.mxu0 0.0
    %1096 = vmatpush2.msra.mxu0 0.0
    %1097 = vmatprep.subr.mxu0 0.0
    %1098 = vmatpush2.msra.mxu0 0.0
    %1099 = vmatprep.subr.mxu0 0.0
    %1100 = vmatpush2.msra.mxu0 0.0
    %1101 = vmatprep.subr.mxu0 0.0
    %1102 = vmatpush2.msra.mxu0 0.0
    %1103 = vmatprep.subr.mxu0 0.0
    %1104 = vmatpush2.msra.mxu0 0.0
    %1105 = vmatprep.subr.mxu0 0.0
    %1106 = vmatpush2.msra.mxu0 0.0
    %1107 = vmatprep.mubr.f32.mxu0 0.0
    %1108 = vmatmul.mubr.f32.gmra.mxu0 %v995
    %v1109 = vpop.f32.mrf.mxu0
    %v1110 = vadd.f32 %v1027, %v1109
    %v1111 = vpop.f32.mrf.mxu0
    %1112 = vmatprep.mubr.f32.mxu0 0.0
    %1113 = vmatmul.mubr.f32.gmra.mxu0 %v996
    %v1114 = vpop.f32.mrf.mxu0
    %v1115 = vadd.f32 %v1028, %v1114
    %v1116 = vpop.f32.mrf.mxu0
    %1117 = vmatprep.mubr.f32.mxu0 0.0
    %1118 = vmatmul.mubr.f32.gmra.mxu0 %v997
    %v1119 = vpop.f32.mrf.mxu0
    %v1120 = vadd.f32 %v1029, %v1119
    %v1121 = vpop.f32.mrf.mxu0
    %1122 = vmatprep.mubr.f32.mxu0 0.0
    %1123 = vmatmul.mubr.f32.gmra.mxu0 %v998
    %v1124 = vpop.f32.mrf.mxu0
    %v1125 = vadd.f32 %v1030, %v1124
    %v1126 = vpop.f32.mrf.mxu0
    %1127 = vmatprep.mubr.f32.mxu0 0.0
    %1128 = vmatmul.mubr.f32.gmra.mxu0 %v999
    %v1129 = vpop.f32.mrf.mxu0
    %v1130 = vadd.f32 %v1031, %v1129
    %v1131 = vpop.f32.mrf.mxu0
    %1132 = vmatprep.mubr.f32.mxu0 0.0
    %1133 = vmatmul.mubr.f32.gmra.mxu0 %v1000
    %v1134 = vpop.f32.mrf.mxu0
    %v1135 = vadd.f32 %v1032, %v1134
    %v1136 = vpop.f32.mrf.mxu0
    %1137 = vmatprep.mubr.f32.mxu0 0.0
    %1138 = vmatmul.mubr.f32.gmra.mxu0 %v1001
    %v1139 = vpop.f32.mrf.mxu0
    %v1140 = vadd.f32 %v1033, %v1139
    %v1141 = vpop.f32.mrf.mxu0
    %1142 = vmatprep.mubr.f32.mxu0 0.0
    %1143 = vmatmul.mubr.f32.gmra.mxu0 %v1002
    %v1144 = vpop.f32.mrf.mxu0
    %v1145 = vadd.f32 %v1034, %v1144
    %v1146 = vpop.f32.mrf.mxu0
    %1147 = vmatprep.mubr.f32.mxu0 0.0
    %1148 = vmatmul.mubr.f32.gmra.mxu0 %v1003
    %v1149 = vpop.f32.mrf.mxu0
    %v1150 = vadd.f32 %v1035, %v1149
    %v1151 = vpop.f32.mrf.mxu0
    %1152 = vmatprep.mubr.f32.mxu0 0.0
    %1153 = vmatmul.mubr.f32.gmra.mxu0 %v1004
    %v1154 = vpop.f32.mrf.mxu0
    %v1155 = vadd.f32 %v1036, %v1154
    %v1156 = vpop.f32.mrf.mxu0
    %1157 = vmatprep.mubr.f32.mxu0 0.0
    %1158 = vmatmul.mubr.f32.gmra.mxu0 %v1005
    %v1159 = vpop.f32.mrf.mxu0
    %v1160 = vadd.f32 %v1037, %v1159
    %v1161 = vpop.f32.mrf.mxu0
    %1162 = vmatprep.mubr.f32.mxu0 0.0
    %1163 = vmatmul.mubr.f32.gmra.mxu0 %v1006
    %v1164 = vpop.f32.mrf.mxu0
    %v1165 = vadd.f32 %v1038, %v1164
    %v1166 = vpop.f32.mrf.mxu0
    %1167 = vmatprep.mubr.f32.mxu0 0.0
    %1168 = vmatmul.mubr.f32.gmra.mxu0 %v1007
    %v1169 = vpop.f32.mrf.mxu0
    %v1170 = vadd.f32 %v1039, %v1169
    %v1171 = vpop.f32.mrf.mxu0
    %1172 = vmatprep.mubr.f32.mxu0 0.0
    %1173 = vmatmul.mubr.f32.gmra.mxu0 %v1008
    %v1174 = vpop.f32.mrf.mxu0
    %v1175 = vadd.f32 %v1040, %v1174
    %v1176 = vpop.f32.mrf.mxu0
    %1177 = vmatprep.mubr.f32.mxu0 0.0
    %1178 = vmatmul.mubr.f32.gmra.mxu0 %v1009
    %v1179 = vpop.f32.mrf.mxu0
    %v1180 = vadd.f32 %v1041, %v1179
    %v1181 = vpop.f32.mrf.mxu0
    %1182 = vmatprep.mubr.f32.mxu0 0.0
    %1183 = vmatmul.mubr.f32.gmra.mxu0 %v1010
    %v1184 = vpop.f32.mrf.mxu0
    %v1185 = vadd.f32 %v1042, %v1184
    %v1186 = vpop.f32.mrf.mxu0
    %1187 = vdwg.mxu0
    %v1188 = vmax.f32 %v1110, 0.0
    %v1189 = vmax.f32 %v1115, 0.0
    %v1190 = vmax.f32 %v1120, 0.0
    %v1191 = vmax.f32 %v1125, 0.0
    %v1192 = vmax.f32 %v1130, 0.0
    %v1193 = vmax.f32 %v1135, 0.0
    %v1194 = vmax.f32 %v1140, 0.0
    %v1195 = vmax.f32 %v1145, 0.0
    %v1196 = vmax.f32 %v1150, 0.0
    %v1197 = vmax.f32 %v1155, 0.0
    %v1198 = vmax.f32 %v1160, 0.0
    %v1199 = vmax.f32 %v1165, 0.0
    %v1200 = vmax.f32 %v1170, 0.0
    %v1201 = vmax.f32 %v1175, 0.0
    %v1202 = vmax.f32 %v1180, 0.0
    %v1203 = vmax.f32 %v1185, 0.0
    %v1204 = vld [vmem:[%s6] sm:$0x1]
    %s1205 = sld [smem:[#allocation3]]
    %v1206 = vstv %s1205
    %1207 = vmatprep.subr.mxu0 0.0
    %1208 = vmatpush1.xpose.msra.mxu0 %v1203
    %1209 = vmatprep.subr.mxu0 0.0
    %1210 = vmatpush1.xpose.msra.mxu0 %v1202
    %1211 = vmatprep.subr.mxu0 0.0
    %1212 = vmatpush1.xpose.msra.mxu0 %v1201
    %1213 = vmatprep.subr.mxu0 0.0
    %1214 = vmatpush1.xpose.msra.mxu0 %v1200
    %1215 = vmatprep.subr.mxu0 0.0
    %1216 = vmatpush1.xpose.msra.mxu0 %v1199
    %1217 = vmatprep.subr.mxu0 0.0
    %1218 = vmatpush1.xpose.msra.mxu0 %v1198
    %1219 = vmatprep.subr.mxu0 0.0
    %1220 = vmatpush1.xpose.msra.mxu0 %v1197
    %1221 = vmatprep.subr.mxu0 0.0
    %1222 = vmatpush1.xpose.msra.mxu0 %v1196
    %1223 = vmatprep.subr.mxu0 0.0
    %1224 = vmatpush1.xpose.msra.mxu0 %v1195
    %1225 = vmatprep.subr.mxu0 0.0
    %1226 = vmatpush1.xpose.msra.mxu0 %v1194
    %1227 = vmatprep.subr.mxu0 0.0
    %1228 = vmatpush1.xpose.msra.mxu0 %v1193
    %1229 = vmatprep.subr.mxu0 0.0
    %1230 = vmatpush1.xpose.msra.mxu0 %v1192
    %1231 = vmatprep.subr.mxu0 0.0
    %1232 = vmatpush1.xpose.msra.mxu0 %v1191
    %1233 = vmatprep.subr.mxu0 0.0
    %1234 = vmatpush1.xpose.msra.mxu0 %v1190
    %1235 = vmatprep.subr.mxu0 0.0
    %1236 = vmatpush1.xpose.msra.mxu0 %v1189
    %1237 = vmatprep.subr.mxu0 0.0
    %1238 = vmatpush1.xpose.msra.mxu0 %v1188
    %1239 = vmatprep.subr.mxu0 0.0
    %1240 = vmatpush2.xpose.msra.mxu0 0.0
    %1241 = vmatprep.subr.mxu0 0.0
    %1242 = vmatpush2.xpose.msra.mxu0 0.0
    %1243 = vmatprep.subr.mxu0 0.0
    %1244 = vmatpush2.xpose.msra.mxu0 0.0
    %1245 = vmatprep.subr.mxu0 0.0
    %1246 = vmatpush2.xpose.msra.mxu0 0.0
    %1247 = vmatprep.subr.mxu0 0.0
    %1248 = vmatpush2.xpose.msra.mxu0 0.0
    %1249 = vmatprep.subr.mxu0 0.0
    %1250 = vmatpush2.xpose.msra.mxu0 0.0
    %1251 = vmatprep.subr.mxu0 0.0
    %1252 = vmatpush2.xpose.msra.mxu0 0.0
    %1253 = vmatprep.subr.mxu0 0.0
    %1254 = vmatpush2.xpose.msra.mxu0 0.0
    %1255 = vmatprep.subr.mxu0 0.0
    %1256 = vmatpush2.xpose.msra.mxu0 0.0
    %1257 = vmatprep.subr.mxu0 0.0
    %1258 = vmatpush2.xpose.msra.mxu0 0.0
    %1259 = vmatprep.subr.mxu0 0.0
    %1260 = vmatpush2.xpose.msra.mxu0 0.0
    %1261 = vmatprep.subr.mxu0 0.0
    %1262 = vmatpush2.xpose.msra.mxu0 0.0
    %1263 = vmatprep.subr.mxu0 0.0
    %1264 = vmatpush2.xpose.msra.mxu0 0.0
    %1265 = vmatprep.subr.mxu0 0.0
    %1266 = vmatpush2.xpose.msra.mxu0 0.0
    %1267 = vmatprep.subr.mxu0 0.0
    %1268 = vmatpush2.xpose.msra.mxu0 0.0
    %1269 = vmatprep.subr.mxu0 0.0
    %1270 = vmatpush2.xpose.msra.mxu0 0.0
    %1271 = vmatprep.mubr.f32.mxu0 0.0
    %1272 = vmatmul.mubr.f32.gmra.mxu0 %v1204
    %v1273 = vpop.f32.mrf.mxu0
    %v1274 = vadd.f32 %v1206, %v1273
    %v1275 = vpop.f32.mrf.mxu0
    %1276 = vdwg.mxu0
    %1277 = vst [vmem:[#allocation13] sm:$0x1] %v1274
    // Predicated region
    $region54: #{tpu_custom_call.1} parent=1 // pred_check
      _
    $region55: #{tpu_custom_call.1} parent=1 // pred_check_branch
      %1279 = sbr.rel (0) target = $region57
    $region56: #{tpu_custom_call.1} parent=1 // pred_region
      %s1281 = ssub.s32 16, 16
      %1282 = vsyncadd [#allocation6], %s1281
      %s1284 = sshll.u32 [#allocation13], 4
      %s1285 = int_to_ptr.vmem [resolvable:$true] %s1284
      %1287 = dma.vmem_to_hbm [thread:$0]  %s1285, 16, %s8, [#allocation6]
    $region57: #{tpu_custom_call.1} parent=1 // pred_fallthru
      _
    // Predicated region
    $region58: #{tpu_custom_call.1} parent=1 // pred_check
      _
    $region59: #{tpu_custom_call.1} parent=1 // pred_check_branch
      %1289 = sbr.rel (0) target = $region61
    $region60: #{tpu_custom_call.1} parent=1 // pred_region
      %1290 = dma.done [#allocation6], 16
    $region61: #{tpu_custom_call.1} parent=1 // pred_fallthru
      _
    %1291 = vsyncpa [#allocation5], 1
    %1292 = vsyncpa [#allocation8], 1
    %1293 = vsyncpa [#allocation11], 1
    %1294 = vsyncpa [#allocation6], 1

</llo_original>
